<compile_context>
chip_gen: v7x
topology: tpu7x:2x2x1
jax: 0.10.0
libtpu: 0.0.40
codegen_flags: <defaults>
</compile_context>

<pallas_src>
import math
import jax
import jax.numpy as jnp
from jax.experimental import pallas as pl
from jax.experimental.pallas import tpu as pltpu

# ---- problem sizes (small, consistent with the module) ----------------------
B = 2          # batch
S = 8          # sequence length
D_MODEL = 32   # d_model
N_HEADS = 4    # n_heads
D_HEAD = D_MODEL // N_HEADS
D_FF = 64      # feedforward_dim
BN_EPS = 1e-5

# Sublane row offsets inside the single packed (PARAM_ROWS, 128) param slab.
ROW_WQKV = 0                       # rows   0..31 : Wqkv^T  (E, 3E)  (q-scale folded in)
ROW_WO = D_MODEL                   # rows  32..63 : Wo^T    (E, E)
ROW_W1 = 2 * D_MODEL               # rows  64..95 : W1^T    (E, D_FF)
ROW_W2 = 3 * D_MODEL               # rows  96..159: W2^T    (D_FF, E)
ROW_VEC = 3 * D_MODEL + D_FF       # rows 160..167: bqkv, bo, b1, b2, g1, be1, g2, be2
PARAM_ROWS = ROW_VEC + 8           # 168 (multiple of 8)


def encoder_kernel(x_ref, p_ref, o_ref):
    N, E = x_ref.shape                     # (B*S, E)
    x = x_ref[...]

    # one aligned 8-row load for all small parameter vectors
    vecs = p_ref[ROW_VEC:ROW_VEC + 8, :]   # (8, 128)
    bqkv = vecs[0:1, 0:3 * E]
    bo = vecs[1:2, 0:E]
    b1 = vecs[2:3, 0:D_FF]
    b2 = vecs[3:4, 0:E]
    g1 = vecs[4:5, 0:E]
    be1 = vecs[5:6, 0:E]
    g2 = vecs[6:7, 0:E]
    be2 = vecs[7:8, 0:E]

    # --- fused QKV projection (one MXU matmul); q-scale pre-folded into W ---
    qkv = jnp.dot(x, p_ref[ROW_WQKV:ROW_WQKV + E, 0:3 * E],
                  preferred_element_type=jnp.float32) + bqkv   # (N, 3E)
    q = qkv[:, 0:E]
    k = qkv[:, E:2 * E]
    v = qkv[:, 2 * E:3 * E]

    # --- attention: per-head einsums batched over B; per-head output
    #     projection accumulated directly (no lane concat); residual + output
    #     bias folded into the accumulator ---
    y = x + bo
    for h in range(N_HEADS):
        cs, ce = h * D_HEAD, (h + 1) * D_HEAD
        qh = q[:, cs:ce].reshape(B, S, D_HEAD)      # sublane-split only
        kh = k[:, cs:ce].reshape(B, S, D_HEAD)
        vh = v[:, cs:ce].reshape(B, S, D_HEAD)
        s = jnp.einsum('bqd,bkd->bqk', qh, kh,
                       preferred_element_type=jnp.float32)     # (B, S, S)
        s = s - jnp.max(s, axis=-1, keepdims=True)
        p = jnp.exp(s)
        p = p * pl.reciprocal(jnp.sum(p, axis=-1, keepdims=True), approx=True)
        oh = jnp.einsum('bqk,bkd->bqd', p, vh,
                        preferred_element_type=jnp.float32)    # (B, S, Dh)
        # aligned sublane row-slice of Wo inside the packed slab
        y = y + jnp.dot(oh.reshape(N, D_HEAD),
                        p_ref[ROW_WO + cs:ROW_WO + ce, 0:E],
                        preferred_element_type=jnp.float32)

    # --- BatchNorm1: centered two-pass batch stats; row-sums on the MXU ---
    ones_row = jnp.full((1, N), 1.0 / N, dtype=jnp.float32)
    m1 = jnp.dot(ones_row, y, preferred_element_type=jnp.float32)        # (1, E)
    yc = y - m1
    var1 = jnp.dot(ones_row, yc * yc, preferred_element_type=jnp.float32)
    y = yc * (jax.lax.rsqrt(var1 + BN_EPS) * g1) + be1

    # --- feedforward: Linear -> ReLU -> Linear, + residual ---
    h1 = jnp.dot(y, p_ref[ROW_W1:ROW_W1 + E, 0:D_FF],
                 preferred_element_type=jnp.float32) + b1
    h1 = jnp.maximum(h1, 0.0)
    z = y + jnp.dot(h1, p_ref[ROW_W2:ROW_W2 + D_FF, 0:E],
                    preferred_element_type=jnp.float32) + b2

    # --- BatchNorm2 ---
    m2 = jnp.dot(ones_row, z, preferred_element_type=jnp.float32)
    zc = z - m2
    var2 = jnp.dot(ones_row, zc * zc, preferred_element_type=jnp.float32)
    o_ref[...] = zc * (jax.lax.rsqrt(var2 + BN_EPS) * g2) + be2


def pack_params(params):
    """Pack all weights and vectors into one (PARAM_ROWS, 128) slab (one DMA).

    The 1/sqrt(D_HEAD) query scale is folded into the Q columns of Wqkv/bqkv
    (one-time cost at pack time, not in the per-call path).
    """
    (wqkv_t, bqkv, wo_t, bo, w1_t, b1, w2_t, b2, g1, be1, g2, be2) = params
    scale = 1.0 / math.sqrt(D_HEAD)
    wqkv_t = wqkv_t.at[:, :D_MODEL].multiply(scale)
    bqkv = bqkv.at[:, :D_MODEL].multiply(scale)

    slab = jnp.zeros((PARAM_ROWS, 128), jnp.float32)
    slab = slab.at[ROW_WQKV:ROW_WQKV + D_MODEL, 0:3 * D_MODEL].set(wqkv_t)
    slab = slab.at[ROW_WO:ROW_WO + D_MODEL, 0:D_MODEL].set(wo_t)
    slab = slab.at[ROW_W1:ROW_W1 + D_MODEL, 0:D_FF].set(w1_t)
    slab = slab.at[ROW_W2:ROW_W2 + D_FF, 0:D_MODEL].set(w2_t)
    for i, vec in enumerate((bqkv, bo, b1, b2, g1, be1, g2, be2)):
        vec = vec.reshape(-1)
        slab = slab.at[ROW_VEC + i, :vec.shape[0]].set(vec)
    return slab


def encoder_layer(x, slab):
    # lane-dense 2-D I/O: flatten / unflatten in the wrapper (free in XLA)
    x2 = x.reshape(B * S, D_MODEL)
    out = pl.pallas_call(
        encoder_kernel,
        out_shape=jax.ShapeDtypeStruct((B * S, D_MODEL), jnp.float32),
        grid=(1,),
        in_specs=[
            pl.BlockSpec((B * S, D_MODEL), lambda i: (0, 0)),
            pl.BlockSpec((PARAM_ROWS, 128), lambda i: (0, 0)),
        ],
        out_specs=pl.BlockSpec((B * S, D_MODEL), lambda i: (0, 0)),
        compiler_params=pltpu.CompilerParams(
            dimension_semantics=("arbitrary",)),
    )(x2, slab)
    return out.reshape(B, S, D_MODEL)


def reference(x, params):
    """Pure-JAX reference with identical math (sanity check)."""
    (wqkv_t, bqkv, wo_t, bo, w1_t, b1, w2_t, b2, g1, be1, g2, be2) = params
    x2 = x.reshape(B * S, D_MODEL)
    qkv = x2 @ wqkv_t + bqkv
    q, k, v = qkv[:, :D_MODEL], qkv[:, D_MODEL:2 * D_MODEL], qkv[:, 2 * D_MODEL:]
    scale = 1.0 / math.sqrt(D_HEAD)
    attn = jnp.zeros((B * S, D_MODEL), jnp.float32)
    for b in range(B):
        for h in range(N_HEADS):
            rs, re = b * S, (b + 1) * S
            cs, ce = h * D_HEAD, (h + 1) * D_HEAD
            s = (q[rs:re, cs:ce] * scale) @ k[rs:re, cs:ce].T
            p = jax.nn.softmax(s, axis=-1)
            attn = attn.at[rs:re, cs:ce].set(p @ v[rs:re, cs:ce])
    y = x2 + attn @ wo_t + bo
    m1 = y.mean(0, keepdims=True)
    v1 = ((y - m1) ** 2).mean(0, keepdims=True)
    y = (y - m1) / jnp.sqrt(v1 + BN_EPS) * g1 + be1
    ffn = jnp.maximum(y @ w1_t + b1, 0.0) @ w2_t + b2
    z = y + ffn
    m2 = z.mean(0, keepdims=True)
    v2 = ((z - m2) ** 2).mean(0, keepdims=True)
    z = (z - m2) / jnp.sqrt(v2 + BN_EPS) * g2 + be2
    return z.reshape(B, S, D_MODEL)


def make_params(key):
    ks = jax.random.split(key, 12)
    # Weights are stored pre-transposed (in_dim x out_dim) so the kernel does
    # x @ W_t without an in-kernel transpose.
    wqkv_t = 0.05 * jax.random.normal(ks[0], (D_MODEL, 3 * D_MODEL), jnp.float32)
    bqkv = 0.05 * jax.random.normal(ks[1], (1, 3 * D_MODEL), jnp.float32)
    wo_t = 0.05 * jax.random.normal(ks[2], (D_MODEL, D_MODEL), jnp.float32)
    bo = 0.05 * jax.random.normal(ks[3], (1, D_MODEL), jnp.float32)
    w1_t = 0.05 * jax.random.normal(ks[4], (D_MODEL, D_FF), jnp.float32)
    b1 = 0.05 * jax.random.normal(ks[5], (1, D_FF), jnp.float32)
    w2_t = 0.05 * jax.random.normal(ks[6], (D_FF, D_MODEL), jnp.float32)
    b2 = 0.05 * jax.random.normal(ks[7], (1, D_MODEL), jnp.float32)
    g1 = 1.0 + 0.1 * jax.random.normal(ks[8], (1, D_MODEL), jnp.float32)
    be1 = 0.1 * jax.random.normal(ks[9], (1, D_MODEL), jnp.float32)
    g2 = 1.0 + 0.1 * jax.random.normal(ks[10], (1, D_MODEL), jnp.float32)
    be2 = 0.1 * jax.random.normal(ks[11], (1, D_MODEL), jnp.float32)
    return (wqkv_t, bqkv, wo_t, bo, w1_t, b1, w2_t, b2, g1, be1, g2, be2)


if __name__ == "__main__":
    key = jax.random.PRNGKey(0)
    kx, kp = jax.random.split(key)
    x = jax.random.normal(kx, (B, S, D_MODEL), jnp.float32)
    params = make_params(kp)
    slab = pack_params(params)

    out = encoder_layer(x, slab)
    out = jax.block_until_ready(out)

    ref = reference(x, params)
    assert out.shape == (B, S, D_MODEL)
    assert bool(jnp.allclose(out, ref, atol=3e-2, rtol=3e-2)), "mismatch vs reference"

    print("KERNEL_OK")
</pallas_src>

<mosaic_0001>
module attributes {stable_mosaic.version = 11 : i64} {
  func.func @encoder_kernel(%arg0: i32, %arg1: memref<16x32xf32, #tpu.memory_space<vmem>>, %arg2: memref<168x128xf32, #tpu.memory_space<vmem>>, %arg3: memref<16x32xf32, #tpu.memory_space<vmem>>) attributes {dimension_semantics = [#tpu.dimension_semantics<arbitrary>], iteration_bounds = array<i64: 1>, scalar_prefetch = 0 : i64, scratch_operands = 0 : i64, tpu.core_type = #tpu.core_type<tc>, window_params = [{pipeline_mode = #tpu.pipeline_mode<synchronous>, transform_indices = @transform_0, window_bounds = array<i64: 16, 32>}, {pipeline_mode = #tpu.pipeline_mode<synchronous>, transform_indices = @transform_1, window_bounds = array<i64: 168, 128>}, {pipeline_mode = #tpu.pipeline_mode<synchronous>, transform_indices = @transform_2, window_bounds = array<i64: 16, 32>}]} {
    %c0 = arith.constant 0 : index
    %c0_0 = arith.constant 0 : index
    %0 = vector.load %arg1[%c0, %c0_0] : memref<16x32xf32, #tpu.memory_space<vmem>>, vector<16x32xf32>
    %c160 = arith.constant 160 : index
    %c0_1 = arith.constant 0 : index
    %1 = vector.load %arg2[%c160, %c0_1] : memref<168x128xf32, #tpu.memory_space<vmem>>, vector<8x128xf32>
    %2 = vector.extract_strided_slice %1 {offsets = [0, 0], sizes = [1, 96], strides = [1, 1]} : vector<8x128xf32> to vector<1x96xf32>
    %3 = vector.extract_strided_slice %1 {offsets = [1, 0], sizes = [1, 32], strides = [1, 1]} : vector<8x128xf32> to vector<1x32xf32>
    %4 = vector.extract_strided_slice %1 {offsets = [2, 0], sizes = [1, 64], strides = [1, 1]} : vector<8x128xf32> to vector<1x64xf32>
    %5 = vector.extract_strided_slice %1 {offsets = [3, 0], sizes = [1, 32], strides = [1, 1]} : vector<8x128xf32> to vector<1x32xf32>
    %6 = vector.extract_strided_slice %1 {offsets = [4, 0], sizes = [1, 32], strides = [1, 1]} : vector<8x128xf32> to vector<1x32xf32>
    %7 = vector.extract_strided_slice %1 {offsets = [5, 0], sizes = [1, 32], strides = [1, 1]} : vector<8x128xf32> to vector<1x32xf32>
    %8 = vector.extract_strided_slice %1 {offsets = [6, 0], sizes = [1, 32], strides = [1, 1]} : vector<8x128xf32> to vector<1x32xf32>
    %9 = vector.extract_strided_slice %1 {offsets = [7, 0], sizes = [1, 32], strides = [1, 1]} : vector<8x128xf32> to vector<1x32xf32>
    %c0_2 = arith.constant 0 : index
    %c0_3 = arith.constant 0 : index
    %10 = vector.load %arg2[%c0_2, %c0_3] : memref<168x128xf32, #tpu.memory_space<vmem>>, vector<32x96xf32>
    %cst = arith.constant dense<0.000000e+00> : vector<16x96xf32>
    %11 = tpu.matmul %0, %10, %cst {dimension_numbers = #tpu.dot_dimension_numbers<[1], [0], [0], [1], [0, 0, 1, 1], [], []>} : vector<16x32xf32>, vector<32x96xf32>, vector<16x96xf32> -> vector<16x96xf32>
    %12 = vector.broadcast %2 : vector<1x96xf32> to vector<16x96xf32>
    %13 = arith.addf %11, %12 : vector<16x96xf32>
    %14 = vector.extract_strided_slice %13 {offsets = [0, 0], sizes = [16, 32], strides = [1, 1]} : vector<16x96xf32> to vector<16x32xf32>
    %15 = vector.extract_strided_slice %13 {offsets = [0, 32], sizes = [16, 32], strides = [1, 1]} : vector<16x96xf32> to vector<16x32xf32>
    %16 = vector.extract_strided_slice %13 {offsets = [0, 64], sizes = [16, 32], strides = [1, 1]} : vector<16x96xf32> to vector<16x32xf32>
    %17 = vector.broadcast %3 : vector<1x32xf32> to vector<16x32xf32>
    %18 = arith.addf %0, %17 : vector<16x32xf32>
    %19 = vector.extract_strided_slice %14 {offsets = [0, 0], sizes = [16, 8], strides = [1, 1]} : vector<16x32xf32> to vector<16x8xf32>
    %20 = vector.shape_cast %19 : vector<16x8xf32> to vector<2x8x8xf32>
    %21 = vector.extract_strided_slice %15 {offsets = [0, 0], sizes = [16, 8], strides = [1, 1]} : vector<16x32xf32> to vector<16x8xf32>
    %22 = vector.shape_cast %21 : vector<16x8xf32> to vector<2x8x8xf32>
    %23 = vector.extract_strided_slice %16 {offsets = [0, 0], sizes = [16, 8], strides = [1, 1]} : vector<16x32xf32> to vector<16x8xf32>
    %24 = vector.shape_cast %23 : vector<16x8xf32> to vector<2x8x8xf32>
    "tpu.trace_start"() <{level = 10 : i32, message = "bqd,bkd->bqk"}> : () -> ()
    %cst_4 = arith.constant dense<0.000000e+00> : vector<2x8x8xf32>
    %25 = tpu.matmul %20, %22, %cst_4 {dimension_numbers = #tpu.dot_dimension_numbers<[2], [2], [1], [1], [0, 0, 0, 1, 1, 1], [0], [0]>} : vector<2x8x8xf32>, vector<2x8x8xf32>, vector<2x8x8xf32> -> vector<2x8x8xf32>
    "tpu.trace_stop"() : () -> ()
    %cst_5 = arith.constant dense<0xFF800000> : vector<2x8xf32>
    %26 = vector.multi_reduction <maximumf>, %25, %cst_5 [2] : vector<2x8x8xf32> to vector<2x8xf32>
    %27 = vector.shape_cast %26 : vector<2x8xf32> to vector<2x8x1xf32>
    %28 = vector.broadcast %27 : vector<2x8x1xf32> to vector<2x8x8xf32>
    %29 = arith.subf %25, %28 : vector<2x8x8xf32>
    %30 = math.exp %29 : vector<2x8x8xf32>
    %cst_6 = arith.constant dense<0.000000e+00> : vector<2x8xf32>
    %31 = vector.multi_reduction <add>, %30, %cst_6 [2] : vector<2x8x8xf32> to vector<2x8xf32>
    %32 = vector.shape_cast %31 : vector<2x8xf32> to vector<2x8x1xf32>
    %33 = tpu.reciprocal %32 {approx = true} : vector<2x8x1xf32> -> vector<2x8x1xf32>
    %34 = vector.broadcast %33 : vector<2x8x1xf32> to vector<2x8x8xf32>
    %35 = arith.mulf %30, %34 : vector<2x8x8xf32>
    "tpu.trace_start"() <{level = 10 : i32, message = "bqk,bkd->bqd"}> : () -> ()
    %cst_7 = arith.constant dense<0.000000e+00> : vector<2x8x8xf32>
    %36 = tpu.matmul %35, %24, %cst_7 {dimension_numbers = #tpu.dot_dimension_numbers<[2], [1], [1], [2], [0, 0, 0, 1, 1, 2], [0], [0]>} : vector<2x8x8xf32>, vector<2x8x8xf32>, vector<2x8x8xf32> -> vector<2x8x8xf32>
    "tpu.trace_stop"() : () -> ()
    %37 = vector.shape_cast %36 : vector<2x8x8xf32> to vector<16x8xf32>
    %c32 = arith.constant 32 : index
    %c0_8 = arith.constant 0 : index
    %38 = vector.load %arg2[%c32, %c0_8] : memref<168x128xf32, #tpu.memory_space<vmem>>, vector<8x32xf32>
    %cst_9 = arith.constant dense<0.000000e+00> : vector<16x32xf32>
    %39 = tpu.matmul %37, %38, %cst_9 {dimension_numbers = #tpu.dot_dimension_numbers<[1], [0], [0], [1], [0, 0, 1, 1], [], []>} : vector<16x8xf32>, vector<8x32xf32>, vector<16x32xf32> -> vector<16x32xf32>
    %40 = arith.addf %18, %39 : vector<16x32xf32>
    %41 = vector.extract_strided_slice %14 {offsets = [0, 8], sizes = [16, 8], strides = [1, 1]} : vector<16x32xf32> to vector<16x8xf32>
    %42 = vector.shape_cast %41 : vector<16x8xf32> to vector<2x8x8xf32>
    %43 = vector.extract_strided_slice %15 {offsets = [0, 8], sizes = [16, 8], strides = [1, 1]} : vector<16x32xf32> to vector<16x8xf32>
    %44 = vector.shape_cast %43 : vector<16x8xf32> to vector<2x8x8xf32>
    %45 = vector.extract_strided_slice %16 {offsets = [0, 8], sizes = [16, 8], strides = [1, 1]} : vector<16x32xf32> to vector<16x8xf32>
    %46 = vector.shape_cast %45 : vector<16x8xf32> to vector<2x8x8xf32>
    "tpu.trace_start"() <{level = 10 : i32, message = "bqd,bkd->bqk"}> : () -> ()
    %cst_10 = arith.constant dense<0.000000e+00> : vector<2x8x8xf32>
    %47 = tpu.matmul %42, %44, %cst_10 {dimension_numbers = #tpu.dot_dimension_numbers<[2], [2], [1], [1], [0, 0, 0, 1, 1, 1], [0], [0]>} : vector<2x8x8xf32>, vector<2x8x8xf32>, vector<2x8x8xf32> -> vector<2x8x8xf32>
    "tpu.trace_stop"() : () -> ()
    %cst_11 = arith.constant dense<0xFF800000> : vector<2x8xf32>
    %48 = vector.multi_reduction <maximumf>, %47, %cst_11 [2] : vector<2x8x8xf32> to vector<2x8xf32>
    %49 = vector.shape_cast %48 : vector<2x8xf32> to vector<2x8x1xf32>
    %50 = vector.broadcast %49 : vector<2x8x1xf32> to vector<2x8x8xf32>
    %51 = arith.subf %47, %50 : vector<2x8x8xf32>
    %52 = math.exp %51 : vector<2x8x8xf32>
    %cst_12 = arith.constant dense<0.000000e+00> : vector<2x8xf32>
    %53 = vector.multi_reduction <add>, %52, %cst_12 [2] : vector<2x8x8xf32> to vector<2x8xf32>
    %54 = vector.shape_cast %53 : vector<2x8xf32> to vector<2x8x1xf32>
    %55 = tpu.reciprocal %54 {approx = true} : vector<2x8x1xf32> -> vector<2x8x1xf32>
    %56 = vector.broadcast %55 : vector<2x8x1xf32> to vector<2x8x8xf32>
    %57 = arith.mulf %52, %56 : vector<2x8x8xf32>
    "tpu.trace_start"() <{level = 10 : i32, message = "bqk,bkd->bqd"}> : () -> ()
    %cst_13 = arith.constant dense<0.000000e+00> : vector<2x8x8xf32>
    %58 = tpu.matmul %57, %46, %cst_13 {dimension_numbers = #tpu.dot_dimension_numbers<[2], [1], [1], [2], [0, 0, 0, 1, 1, 2], [0], [0]>} : vector<2x8x8xf32>, vector<2x8x8xf32>, vector<2x8x8xf32> -> vector<2x8x8xf32>
    "tpu.trace_stop"() : () -> ()
    %59 = vector.shape_cast %58 : vector<2x8x8xf32> to vector<16x8xf32>
    %c40 = arith.constant 40 : index
    %c0_14 = arith.constant 0 : index
    %60 = vector.load %arg2[%c40, %c0_14] : memref<168x128xf32, #tpu.memory_space<vmem>>, vector<8x32xf32>
    %cst_15 = arith.constant dense<0.000000e+00> : vector<16x32xf32>
    %61 = tpu.matmul %59, %60, %cst_15 {dimension_numbers = #tpu.dot_dimension_numbers<[1], [0], [0], [1], [0, 0, 1, 1], [], []>} : vector<16x8xf32>, vector<8x32xf32>, vector<16x32xf32> -> vector<16x32xf32>
    %62 = arith.addf %40, %61 : vector<16x32xf32>
    %63 = vector.extract_strided_slice %14 {offsets = [0, 16], sizes = [16, 8], strides = [1, 1]} : vector<16x32xf32> to vector<16x8xf32>
    %64 = vector.shape_cast %63 : vector<16x8xf32> to vector<2x8x8xf32>
    %65 = vector.extract_strided_slice %15 {offsets = [0, 16], sizes = [16, 8], strides = [1, 1]} : vector<16x32xf32> to vector<16x8xf32>
    %66 = vector.shape_cast %65 : vector<16x8xf32> to vector<2x8x8xf32>
    %67 = vector.extract_strided_slice %16 {offsets = [0, 16], sizes = [16, 8], strides = [1, 1]} : vector<16x32xf32> to vector<16x8xf32>
    %68 = vector.shape_cast %67 : vector<16x8xf32> to vector<2x8x8xf32>
    "tpu.trace_start"() <{level = 10 : i32, message = "bqd,bkd->bqk"}> : () -> ()
    %cst_16 = arith.constant dense<0.000000e+00> : vector<2x8x8xf32>
    %69 = tpu.matmul %64, %66, %cst_16 {dimension_numbers = #tpu.dot_dimension_numbers<[2], [2], [1], [1], [0, 0, 0, 1, 1, 1], [0], [0]>} : vector<2x8x8xf32>, vector<2x8x8xf32>, vector<2x8x8xf32> -> vector<2x8x8xf32>
    "tpu.trace_stop"() : () -> ()
    %cst_17 = arith.constant dense<0xFF800000> : vector<2x8xf32>
    %70 = vector.multi_reduction <maximumf>, %69, %cst_17 [2] : vector<2x8x8xf32> to vector<2x8xf32>
    %71 = vector.shape_cast %70 : vector<2x8xf32> to vector<2x8x1xf32>
    %72 = vector.broadcast %71 : vector<2x8x1xf32> to vector<2x8x8xf32>
    %73 = arith.subf %69, %72 : vector<2x8x8xf32>
    %74 = math.exp %73 : vector<2x8x8xf32>
    %cst_18 = arith.constant dense<0.000000e+00> : vector<2x8xf32>
    %75 = vector.multi_reduction <add>, %74, %cst_18 [2] : vector<2x8x8xf32> to vector<2x8xf32>
    %76 = vector.shape_cast %75 : vector<2x8xf32> to vector<2x8x1xf32>
    %77 = tpu.reciprocal %76 {approx = true} : vector<2x8x1xf32> -> vector<2x8x1xf32>
    %78 = vector.broadcast %77 : vector<2x8x1xf32> to vector<2x8x8xf32>
    %79 = arith.mulf %74, %78 : vector<2x8x8xf32>
    "tpu.trace_start"() <{level = 10 : i32, message = "bqk,bkd->bqd"}> : () -> ()
    %cst_19 = arith.constant dense<0.000000e+00> : vector<2x8x8xf32>
    %80 = tpu.matmul %79, %68, %cst_19 {dimension_numbers = #tpu.dot_dimension_numbers<[2], [1], [1], [2], [0, 0, 0, 1, 1, 2], [0], [0]>} : vector<2x8x8xf32>, vector<2x8x8xf32>, vector<2x8x8xf32> -> vector<2x8x8xf32>
    "tpu.trace_stop"() : () -> ()
    %81 = vector.shape_cast %80 : vector<2x8x8xf32> to vector<16x8xf32>
    %c48 = arith.constant 48 : index
    %c0_20 = arith.constant 0 : index
    %82 = vector.load %arg2[%c48, %c0_20] : memref<168x128xf32, #tpu.memory_space<vmem>>, vector<8x32xf32>
    %cst_21 = arith.constant dense<0.000000e+00> : vector<16x32xf32>
    %83 = tpu.matmul %81, %82, %cst_21 {dimension_numbers = #tpu.dot_dimension_numbers<[1], [0], [0], [1], [0, 0, 1, 1], [], []>} : vector<16x8xf32>, vector<8x32xf32>, vector<16x32xf32> -> vector<16x32xf32>
    %84 = arith.addf %62, %83 : vector<16x32xf32>
    %85 = vector.extract_strided_slice %14 {offsets = [0, 24], sizes = [16, 8], strides = [1, 1]} : vector<16x32xf32> to vector<16x8xf32>
    %86 = vector.shape_cast %85 : vector<16x8xf32> to vector<2x8x8xf32>
    %87 = vector.extract_strided_slice %15 {offsets = [0, 24], sizes = [16, 8], strides = [1, 1]} : vector<16x32xf32> to vector<16x8xf32>
    %88 = vector.shape_cast %87 : vector<16x8xf32> to vector<2x8x8xf32>
    %89 = vector.extract_strided_slice %16 {offsets = [0, 24], sizes = [16, 8], strides = [1, 1]} : vector<16x32xf32> to vector<16x8xf32>
    %90 = vector.shape_cast %89 : vector<16x8xf32> to vector<2x8x8xf32>
    "tpu.trace_start"() <{level = 10 : i32, message = "bqd,bkd->bqk"}> : () -> ()
    %cst_22 = arith.constant dense<0.000000e+00> : vector<2x8x8xf32>
    %91 = tpu.matmul %86, %88, %cst_22 {dimension_numbers = #tpu.dot_dimension_numbers<[2], [2], [1], [1], [0, 0, 0, 1, 1, 1], [0], [0]>} : vector<2x8x8xf32>, vector<2x8x8xf32>, vector<2x8x8xf32> -> vector<2x8x8xf32>
    "tpu.trace_stop"() : () -> ()
    %cst_23 = arith.constant dense<0xFF800000> : vector<2x8xf32>
    %92 = vector.multi_reduction <maximumf>, %91, %cst_23 [2] : vector<2x8x8xf32> to vector<2x8xf32>
    %93 = vector.shape_cast %92 : vector<2x8xf32> to vector<2x8x1xf32>
    %94 = vector.broadcast %93 : vector<2x8x1xf32> to vector<2x8x8xf32>
    %95 = arith.subf %91, %94 : vector<2x8x8xf32>
    %96 = math.exp %95 : vector<2x8x8xf32>
    %cst_24 = arith.constant dense<0.000000e+00> : vector<2x8xf32>
    %97 = vector.multi_reduction <add>, %96, %cst_24 [2] : vector<2x8x8xf32> to vector<2x8xf32>
    %98 = vector.shape_cast %97 : vector<2x8xf32> to vector<2x8x1xf32>
    %99 = tpu.reciprocal %98 {approx = true} : vector<2x8x1xf32> -> vector<2x8x1xf32>
    %100 = vector.broadcast %99 : vector<2x8x1xf32> to vector<2x8x8xf32>
    %101 = arith.mulf %96, %100 : vector<2x8x8xf32>
    "tpu.trace_start"() <{level = 10 : i32, message = "bqk,bkd->bqd"}> : () -> ()
    %cst_25 = arith.constant dense<0.000000e+00> : vector<2x8x8xf32>
    %102 = tpu.matmul %101, %90, %cst_25 {dimension_numbers = #tpu.dot_dimension_numbers<[2], [1], [1], [2], [0, 0, 0, 1, 1, 2], [0], [0]>} : vector<2x8x8xf32>, vector<2x8x8xf32>, vector<2x8x8xf32> -> vector<2x8x8xf32>
    "tpu.trace_stop"() : () -> ()
    %103 = vector.shape_cast %102 : vector<2x8x8xf32> to vector<16x8xf32>
    %c56 = arith.constant 56 : index
    %c0_26 = arith.constant 0 : index
    %104 = vector.load %arg2[%c56, %c0_26] : memref<168x128xf32, #tpu.memory_space<vmem>>, vector<8x32xf32>
    %cst_27 = arith.constant dense<0.000000e+00> : vector<16x32xf32>
    %105 = tpu.matmul %103, %104, %cst_27 {dimension_numbers = #tpu.dot_dimension_numbers<[1], [0], [0], [1], [0, 0, 1, 1], [], []>} : vector<16x8xf32>, vector<8x32xf32>, vector<16x32xf32> -> vector<16x32xf32>
    %106 = arith.addf %84, %105 : vector<16x32xf32>
    %cst_28 = arith.constant 6.250000e-02 : f32
    %107 = vector.broadcast %cst_28 : f32 to vector<1x16xf32>
    %cst_29 = arith.constant dense<0.000000e+00> : vector<1x32xf32>
    %108 = tpu.matmul %107, %106, %cst_29 {dimension_numbers = #tpu.dot_dimension_numbers<[1], [0], [0], [1], [0, 0, 1, 1], [], []>} : vector<1x16xf32>, vector<16x32xf32>, vector<1x32xf32> -> vector<1x32xf32>
    %109 = vector.broadcast %108 : vector<1x32xf32> to vector<16x32xf32>
    %110 = arith.subf %106, %109 : vector<16x32xf32>
    %111 = arith.mulf %110, %110 : vector<16x32xf32>
    %cst_30 = arith.constant dense<0.000000e+00> : vector<1x32xf32>
    %112 = tpu.matmul %107, %111, %cst_30 {dimension_numbers = #tpu.dot_dimension_numbers<[1], [0], [0], [1], [0, 0, 1, 1], [], []>} : vector<1x16xf32>, vector<16x32xf32>, vector<1x32xf32> -> vector<1x32xf32>
    %cst_31 = arith.constant 9.99999974E-6 : f32
    %113 = vector.broadcast %cst_31 : f32 to vector<1x32xf32>
    %114 = arith.addf %112, %113 : vector<1x32xf32>
    %115 = math.rsqrt %114 : vector<1x32xf32>
    %116 = arith.mulf %115, %6 : vector<1x32xf32>
    %117 = vector.broadcast %116 : vector<1x32xf32> to vector<16x32xf32>
    %118 = arith.mulf %110, %117 : vector<16x32xf32>
    %119 = vector.broadcast %7 : vector<1x32xf32> to vector<16x32xf32>
    %120 = arith.addf %118, %119 : vector<16x32xf32>
    %c64 = arith.constant 64 : index
    %c0_32 = arith.constant 0 : index
    %121 = vector.load %arg2[%c64, %c0_32] : memref<168x128xf32, #tpu.memory_space<vmem>>, vector<32x64xf32>
    %cst_33 = arith.constant dense<0.000000e+00> : vector<16x64xf32>
    %122 = tpu.matmul %120, %121, %cst_33 {dimension_numbers = #tpu.dot_dimension_numbers<[1], [0], [0], [1], [0, 0, 1, 1], [], []>} : vector<16x32xf32>, vector<32x64xf32>, vector<16x64xf32> -> vector<16x64xf32>
    %123 = vector.broadcast %4 : vector<1x64xf32> to vector<16x64xf32>
    %124 = arith.addf %122, %123 : vector<16x64xf32>
    %cst_34 = arith.constant 0.000000e+00 : f32
    %125 = vector.broadcast %cst_34 : f32 to vector<16x64xf32>
    %126 = arith.maximumf %124, %125 : vector<16x64xf32>
    %c96 = arith.constant 96 : index
    %c0_35 = arith.constant 0 : index
    %127 = vector.load %arg2[%c96, %c0_35] : memref<168x128xf32, #tpu.memory_space<vmem>>, vector<64x32xf32>
    %cst_36 = arith.constant dense<0.000000e+00> : vector<16x32xf32>
    %128 = tpu.matmul %126, %127, %cst_36 {dimension_numbers = #tpu.dot_dimension_numbers<[1], [0], [0], [1], [0, 0, 1, 1], [], []>} : vector<16x64xf32>, vector<64x32xf32>, vector<16x32xf32> -> vector<16x32xf32>
    %129 = arith.addf %120, %128 : vector<16x32xf32>
    %130 = vector.broadcast %5 : vector<1x32xf32> to vector<16x32xf32>
    %131 = arith.addf %129, %130 : vector<16x32xf32>
    %cst_37 = arith.constant dense<0.000000e+00> : vector<1x32xf32>
    %132 = tpu.matmul %107, %131, %cst_37 {dimension_numbers = #tpu.dot_dimension_numbers<[1], [0], [0], [1], [0, 0, 1, 1], [], []>} : vector<1x16xf32>, vector<16x32xf32>, vector<1x32xf32> -> vector<1x32xf32>
    %133 = vector.broadcast %132 : vector<1x32xf32> to vector<16x32xf32>
    %134 = arith.subf %131, %133 : vector<16x32xf32>
    %135 = arith.mulf %134, %134 : vector<16x32xf32>
    %cst_38 = arith.constant dense<0.000000e+00> : vector<1x32xf32>
    %136 = tpu.matmul %107, %135, %cst_38 {dimension_numbers = #tpu.dot_dimension_numbers<[1], [0], [0], [1], [0, 0, 1, 1], [], []>} : vector<1x16xf32>, vector<16x32xf32>, vector<1x32xf32> -> vector<1x32xf32>
    %cst_39 = arith.constant 9.99999974E-6 : f32
    %137 = vector.broadcast %cst_39 : f32 to vector<1x32xf32>
    %138 = arith.addf %136, %137 : vector<1x32xf32>
    %139 = math.rsqrt %138 : vector<1x32xf32>
    %140 = arith.mulf %139, %8 : vector<1x32xf32>
    %141 = vector.broadcast %140 : vector<1x32xf32> to vector<16x32xf32>
    %142 = arith.mulf %134, %141 : vector<16x32xf32>
    %143 = vector.broadcast %9 : vector<1x32xf32> to vector<16x32xf32>
    %144 = arith.addf %142, %143 : vector<16x32xf32>
    %c0_40 = arith.constant 0 : index
    %c0_41 = arith.constant 0 : index
    %145 = vector.load %arg3[%c0_40, %c0_41] : memref<16x32xf32, #tpu.memory_space<vmem>>, vector<16x32xf32>
    tpu.vector_store %arg3[%c0_40, %c0_41], %144 {strides = array<i32>} : memref<16x32xf32, #tpu.memory_space<vmem>>, vector<16x32xf32>,
    return
  }
  func.func @transform_0(%arg0: i32) -> (i32, i32) {
    %c0_i32 = arith.constant 0 : i32
    %c0_i32_0 = arith.constant 0 : i32
    %c0_i32_1 = arith.constant 0 : i32
    return %c0_i32, %c0_i32_0 : i32, i32
  }
  func.func @transform_1(%arg0: i32) -> (i32, i32) {
    %c0_i32 = arith.constant 0 : i32
    %c0_i32_0 = arith.constant 0 : i32
    %c0_i32_1 = arith.constant 0 : i32
    return %c0_i32, %c0_i32_0 : i32, i32
  }
  func.func @transform_2(%arg0: i32) -> (i32, i32) {
    %c0_i32 = arith.constant 0 : i32
    %c0_i32_0 = arith.constant 0 : i32
    %c0_i32_1 = arith.constant 0 : i32
    return %c0_i32, %c0_i32_0 : i32, i32
  }
}

</mosaic_0001>

<llo_original>
// kernel: tpu_custom_call.1
$region0: #{tpu_custom_call.1}
  #allocation0 [shape = 'u32[]', space=smem, size = 0x4, offset = 0x4, fixed_abs, tag = 'smem constant byte address 0x4 - core index']
  #allocation1 [shape = 'u32[144,128]{1,0:T(1,128)}', space=vmem, size = 0x12000, scoped, tag = 'internal scratch']
  %s0 = inlined_call_operand.hbm [shape: f32[16,32], index: 0, kind: input, shape index: {}]
  %s1 = inlined_call_operand.hbm [shape: f32[168,128], index: 1, kind: input, shape index: {}]
  %s2 = inlined_call_operand.hbm [shape: f32[16,32], index: 2, kind: output, shape index: {}]
  %s3 = sld [smem:[#allocation0]]
  $region26: #{tpu_custom_call.1} parent=0
    _
  %s5 = ssub.s32 1, %s3
  %s6 = scalar_select 0, %s5, %s3
  $region1: #{tpu_custom_call.1} parent=0
    #allocation2 [shape = 'u8[8192]{0}', space=vmem, size = 0x2000, scoped, tag = 'input window, operand 0, single buffered']
    #allocation3 [shape = 's32[1]{0}', space=sflag, size = 0x4, scoped, tag = 'scoped memory for tpu_custom_call.1']
    #allocation4 [shape = 's32[1]{0}', space=sflag, size = 0x4, scoped, tag = 'scoped memory for tpu_custom_call.1']
    #allocation5 [shape = 'u8[86016]{0}', space=vmem, size = 0x15000, scoped, tag = 'input window, operand 1, single buffered']
    #allocation6 [shape = 's32[1]{0}', space=sflag, size = 0x4, scoped, tag = 'scoped memory for tpu_custom_call.1']
    #allocation7 [shape = 'u8[8192]{0}', space=vmem, size = 0x2000, scoped, tag = 'output window, operand 0, single buffered']
    %7 = vsyncpa [#allocation3], 0
    %8 = vsyncpa [#allocation6], 0
    %9 = vsyncpa [#allocation4], 0
    // Predicated region
    $region2: #{tpu_custom_call.1} parent=1 // pred_check
      _
    $region3: #{tpu_custom_call.1} parent=1 // pred_check_branch
      %11 = sbr.rel (0) target = $region5
    $region4: #{tpu_custom_call.1} parent=1 // pred_region
      %s13 = ssub.s32 256, 256
      %14 = vsyncadd [#allocation3], %s13
      %s15 = sshll.u32 [#allocation2], 4
      %s16 = int_to_ptr.vmem [resolvable:$true] %s15
      %21 = dma.hbm_to_vmem [thread:$0]  %s0, 256, %s16, [#allocation3], 128, 128, 8
    $region5: #{tpu_custom_call.1} parent=1 // pred_fallthru
      _
    // Predicated region
    $region6: #{tpu_custom_call.1} parent=1 // pred_check
      _
    $region7: #{tpu_custom_call.1} parent=1 // pred_check_branch
      %23 = sbr.rel (0) target = $region9
    $region8: #{tpu_custom_call.1} parent=1 // pred_region
      %s25 = ssub.s32 2688, 2688
      %26 = vsyncadd [#allocation6], %s25
      %s27 = sshll.u32 [#allocation5], 4
      %s28 = int_to_ptr.vmem [resolvable:$true] %s27
      %33 = dma.hbm_to_vmem [thread:$0]  %s1, 2688, %s28, [#allocation6], 128, 128, 8
    $region9: #{tpu_custom_call.1} parent=1 // pred_fallthru
      _
    // Predicated region
    $region10: #{tpu_custom_call.1} parent=1 // pred_check
      _
    $region11: #{tpu_custom_call.1} parent=1 // pred_check_branch
      %35 = sbr.rel (0) target = $region13
    $region12: #{tpu_custom_call.1} parent=1 // pred_region
      %36 = dma.done [#allocation3], 256
    $region13: #{tpu_custom_call.1} parent=1 // pred_fallthru
      _
    // Predicated region
    $region14: #{tpu_custom_call.1} parent=1 // pred_check
      _
    $region15: #{tpu_custom_call.1} parent=1 // pred_check_branch
      %38 = sbr.rel (0) target = $region17
    $region16: #{tpu_custom_call.1} parent=1 // pred_region
      %39 = dma.done [#allocation6], 2688
    $region17: #{tpu_custom_call.1} parent=1 // pred_fallthru
      _
    %v40 = vld [vmem:[#allocation2] sm:$0xff]
    %v41 = vld [vmem:[#allocation2 + $0x8] sm:$0xff]
    %v42 = vld [vmem:[#allocation5 + $0xa0] sm:$0xff]
    %v43 = vld [vmem:[#allocation5] sm:$0xff]
    %v44 = vld [vmem:[#allocation5 + $0x8] sm:$0xff]
    %v45 = vld [vmem:[#allocation5 + $0x10] sm:$0xff]
    %v46 = vld [vmem:[#allocation5 + $0x18] sm:$0xff]
    %v47 = vlaneseq
    %v48 = vshrl.u32 %v47, 7
    %v49 = vsub.s32 0, %v48
    %v50 = vrot.slane %v42, %v49
    %vm51 = vcmask 261120
    %v53 = vsel %vm51, %v40, 0
    %v56 = vsel %vm51, %v41, 0
    %58 = vmatprep.subr.mxu0 0.0
    %59 = vmatpush1.msra.mxu0 %v43
    %60 = vmatprep.subr.mxu0 0.0
    %61 = vmatpush1.msra.mxu0 %v44
    %62 = vmatprep.subr.mxu0 0.0
    %63 = vmatpush1.msra.mxu0 %v45
    %64 = vmatprep.subr.mxu0 0.0
    %65 = vmatpush1.msra.mxu0 %v46
    %66 = vmatprep.subr.mxu0 0.0
    %67 = vmatpush1.msra.mxu0 0.0
    %68 = vmatprep.subr.mxu0 0.0
    %69 = vmatpush1.msra.mxu0 0.0
    %70 = vmatprep.subr.mxu0 0.0
    %71 = vmatpush1.msra.mxu0 0.0
    %72 = vmatprep.subr.mxu0 0.0
    %73 = vmatpush1.msra.mxu0 0.0
    %74 = vmatprep.subr.mxu0 0.0
    %75 = vmatpush1.msra.mxu0 0.0
    %76 = vmatprep.subr.mxu0 0.0
    %77 = vmatpush1.msra.mxu0 0.0
    %78 = vmatprep.subr.mxu0 0.0
    %79 = vmatpush1.msra.mxu0 0.0
    %80 = vmatprep.subr.mxu0 0.0
    %81 = vmatpush1.msra.mxu0 0.0
    %82 = vmatprep.subr.mxu0 0.0
    %83 = vmatpush1.msra.mxu0 0.0
    %84 = vmatprep.subr.mxu0 0.0
    %85 = vmatpush1.msra.mxu0 0.0
    %86 = vmatprep.subr.mxu0 0.0
    %87 = vmatpush1.msra.mxu0 0.0
    %88 = vmatprep.subr.mxu0 0.0
    %89 = vmatpush1.msra.mxu0 0.0
    %90 = vmatprep.subr.mxu0 0.0
    %91 = vmatpush1.msra.mxu0 0.0
    %92 = vmatprep.subr.mxu0 0.0
    %93 = vmatpush1.msra.mxu0 0.0
    %94 = vmatprep.subr.mxu0 0.0
    %95 = vmatpush1.msra.mxu0 0.0
    %96 = vmatprep.subr.mxu0 0.0
    %97 = vmatpush1.msra.mxu0 0.0
    %98 = vmatprep.subr.mxu0 0.0
    %99 = vmatpush1.msra.mxu0 0.0
    %100 = vmatprep.subr.mxu0 0.0
    %101 = vmatpush1.msra.mxu0 0.0
    %102 = vmatprep.subr.mxu0 0.0
    %103 = vmatpush1.msra.mxu0 0.0
    %104 = vmatprep.subr.mxu0 0.0
    %105 = vmatpush1.msra.mxu0 0.0
    %106 = vmatprep.subr.mxu0 0.0
    %107 = vmatpush1.msra.mxu0 0.0
    %108 = vmatprep.subr.mxu0 0.0
    %109 = vmatpush1.msra.mxu0 0.0
    %110 = vmatprep.subr.mxu0 0.0
    %111 = vmatpush1.msra.mxu0 0.0
    %112 = vmatprep.subr.mxu0 0.0
    %113 = vmatpush1.msra.mxu0 0.0
    %114 = vmatprep.subr.mxu0 0.0
    %115 = vmatpush1.msra.mxu0 0.0
    %116 = vmatprep.subr.mxu0 0.0
    %117 = vmatpush1.msra.mxu0 0.0
    %118 = vmatprep.subr.mxu0 0.0
    %119 = vmatpush1.msra.mxu0 0.0
    %120 = vmatprep.subr.mxu0 0.0
    %121 = vmatpush1.msra.mxu0 0.0
    %122 = vmatprep.mubr.f32.mxu0 0.0
    %123 = vmatmul.mubr.f32.gmra.mrb[0].mxu0 %v53
    %v124 = vpop.f32.mrb[0].mxu0
    %v125 = vadd.f32 %v50, %v124
    %v126 = vpop.f32.mrb[0].mxu0
    %127 = vmatprep.mubr.f32.mxu0 0.0
    %128 = vmatmul.mubr.f32.gmra.mrb[0].mxu0 %v56
    %v129 = vpop.f32.mrb[0].mxu0
    %v130 = vadd.f32 %v50, %v129
    %v131 = vpop.f32.mrb[0].mxu0
    %132 = vdwg.mxu0
    %v133 = vlaneseq
    %v134 = vshrl.u32 %v133, 7
    %v135 = vsub.s32 1, %v134
    %v136 = vrot.slane %v42, %v135
    %v137 = vadd.f32 %v40, %v136
    %v138 = vadd.f32 %v41, %v136
    %140 = vrot.lane.b32.xlu0 %v125, 96
    %v141 = vpop.permute.xlu0 %140
    %vm142 = vcmask 64512
    %v143 = vsel %vm142, %v125, 0
    %v145 = vsel %vm142, %v141, 0
    %147 = vmatprep.subr.mxu0 0.0
    %148 = vmatpush1.xpose.msra.mxu0 %v145
    %149 = vmatprep.subr.mxu0 0.0
    %150 = vmatpush1.xpose.msra.mxu0 0.0
    %151 = vmatprep.subr.mxu0 0.0
    %152 = vmatpush1.xpose.msra.mxu0 0.0
    %153 = vmatprep.subr.mxu0 0.0
    %154 = vmatpush1.xpose.msra.mxu0 0.0
    %155 = vmatprep.subr.mxu0 0.0
    %156 = vmatpush1.xpose.msra.mxu0 0.0
    %157 = vmatprep.subr.mxu0 0.0
    %158 = vmatpush1.xpose.msra.mxu0 0.0
    %159 = vmatprep.subr.mxu0 0.0
    %160 = vmatpush1.xpose.msra.mxu0 0.0
    %161 = vmatprep.subr.mxu0 0.0
    %162 = vmatpush1.xpose.msra.mxu0 0.0
    %163 = vmatprep.subr.mxu0 0.0
    %164 = vmatpush1.xpose.msra.mxu0 0.0
    %165 = vmatprep.subr.mxu0 0.0
    %166 = vmatpush1.xpose.msra.mxu0 0.0
    %167 = vmatprep.subr.mxu0 0.0
    %168 = vmatpush1.xpose.msra.mxu0 0.0
    %169 = vmatprep.subr.mxu0 0.0
    %170 = vmatpush1.xpose.msra.mxu0 0.0
    %171 = vmatprep.subr.mxu0 0.0
    %172 = vmatpush1.xpose.msra.mxu0 0.0
    %173 = vmatprep.subr.mxu0 0.0
    %174 = vmatpush1.xpose.msra.mxu0 0.0
    %175 = vmatprep.subr.mxu0 0.0
    %176 = vmatpush1.xpose.msra.mxu0 0.0
    %177 = vmatprep.subr.mxu0 0.0
    %178 = vmatpush1.xpose.msra.mxu0 0.0
    %179 = vmatprep.subr.mxu0 0.0
    %180 = vmatpush1.xpose.msra.mxu0 0.0
    %181 = vmatprep.subr.mxu0 0.0
    %182 = vmatpush1.xpose.msra.mxu0 0.0
    %183 = vmatprep.subr.mxu0 0.0
    %184 = vmatpush1.xpose.msra.mxu0 0.0
    %185 = vmatprep.subr.mxu0 0.0
    %186 = vmatpush1.xpose.msra.mxu0 0.0
    %187 = vmatprep.subr.mxu0 0.0
    %188 = vmatpush1.xpose.msra.mxu0 0.0
    %189 = vmatprep.subr.mxu0 0.0
    %190 = vmatpush1.xpose.msra.mxu0 0.0
    %191 = vmatprep.subr.mxu0 0.0
    %192 = vmatpush1.xpose.msra.mxu0 0.0
    %193 = vmatprep.subr.mxu0 0.0
    %194 = vmatpush1.xpose.msra.mxu0 0.0
    %195 = vmatprep.subr.mxu0 0.0
    %196 = vmatpush1.xpose.msra.mxu0 0.0
    %197 = vmatprep.subr.mxu0 0.0
    %198 = vmatpush1.xpose.msra.mxu0 0.0
    %199 = vmatprep.subr.mxu0 0.0
    %200 = vmatpush1.xpose.msra.mxu0 0.0
    %201 = vmatprep.subr.mxu0 0.0
    %202 = vmatpush1.xpose.msra.mxu0 0.0
    %203 = vmatprep.subr.mxu0 0.0
    %204 = vmatpush1.xpose.msra.mxu0 0.0
    %205 = vmatprep.subr.mxu0 0.0
    %206 = vmatpush1.xpose.msra.mxu0 0.0
    %207 = vmatprep.subr.mxu0 0.0
    %208 = vmatpush1.xpose.msra.mxu0 0.0
    %209 = vmatprep.subr.mxu0 0.0
    %210 = vmatpush1.xpose.msra.mxu0 0.0
    %211 = vmatprep.mubr.f32.mxu0 0.0
    %212 = vmatmul.mubr.f32.gmra.mrb[0].mxu0 %v143
    %v213 = vpop.f32.mrb[0].mxu0
    %v214 = vadd.f32 0.0, %v213
    %v215 = vpop.f32.mrb[0].mxu0
    %216 = vdwg.mxu0
    %218 = vrot.lane.b32.xlu0 %v130, 96
    %v219 = vpop.permute.xlu0 %218
    %v220 = vsel %vm142, %v130, 0
    %v222 = vsel %vm142, %v219, 0
    %224 = vmatprep.subr.mxu0 0.0
    %225 = vmatpush1.xpose.msra.mxu0 %v222
    %226 = vmatprep.subr.mxu0 0.0
    %227 = vmatpush1.xpose.msra.mxu0 0.0
    %228 = vmatprep.subr.mxu0 0.0
    %229 = vmatpush1.xpose.msra.mxu0 0.0
    %230 = vmatprep.subr.mxu0 0.0
    %231 = vmatpush1.xpose.msra.mxu0 0.0
    %232 = vmatprep.subr.mxu0 0.0
    %233 = vmatpush1.xpose.msra.mxu0 0.0
    %234 = vmatprep.subr.mxu0 0.0
    %235 = vmatpush1.xpose.msra.mxu0 0.0
    %236 = vmatprep.subr.mxu0 0.0
    %237 = vmatpush1.xpose.msra.mxu0 0.0
    %238 = vmatprep.subr.mxu0 0.0
    %239 = vmatpush1.xpose.msra.mxu0 0.0
    %240 = vmatprep.subr.mxu0 0.0
    %241 = vmatpush1.xpose.msra.mxu0 0.0
    %242 = vmatprep.subr.mxu0 0.0
    %243 = vmatpush1.xpose.msra.mxu0 0.0
    %244 = vmatprep.subr.mxu0 0.0
    %245 = vmatpush1.xpose.msra.mxu0 0.0
    %246 = vmatprep.subr.mxu0 0.0
    %247 = vmatpush1.xpose.msra.mxu0 0.0
    %248 = vmatprep.subr.mxu0 0.0
    %249 = vmatpush1.xpose.msra.mxu0 0.0
    %250 = vmatprep.subr.mxu0 0.0
    %251 = vmatpush1.xpose.msra.mxu0 0.0
    %252 = vmatprep.subr.mxu0 0.0
    %253 = vmatpush1.xpose.msra.mxu0 0.0
    %254 = vmatprep.subr.mxu0 0.0
    %255 = vmatpush1.xpose.msra.mxu0 0.0
    %256 = vmatprep.subr.mxu0 0.0
    %257 = vmatpush1.xpose.msra.mxu0 0.0
    %258 = vmatprep.subr.mxu0 0.0
    %259 = vmatpush1.xpose.msra.mxu0 0.0
    %260 = vmatprep.subr.mxu0 0.0
    %261 = vmatpush1.xpose.msra.mxu0 0.0
    %262 = vmatprep.subr.mxu0 0.0
    %263 = vmatpush1.xpose.msra.mxu0 0.0
    %264 = vmatprep.subr.mxu0 0.0
    %265 = vmatpush1.xpose.msra.mxu0 0.0
    %266 = vmatprep.subr.mxu0 0.0
    %267 = vmatpush1.xpose.msra.mxu0 0.0
    %268 = vmatprep.subr.mxu0 0.0
    %269 = vmatpush1.xpose.msra.mxu0 0.0
    %270 = vmatprep.subr.mxu0 0.0
    %271 = vmatpush1.xpose.msra.mxu0 0.0
    %272 = vmatprep.subr.mxu0 0.0
    %273 = vmatpush1.xpose.msra.mxu0 0.0
    %274 = vmatprep.subr.mxu0 0.0
    %275 = vmatpush1.xpose.msra.mxu0 0.0
    %276 = vmatprep.subr.mxu0 0.0
    %277 = vmatpush1.xpose.msra.mxu0 0.0
    %278 = vmatprep.subr.mxu0 0.0
    %279 = vmatpush1.xpose.msra.mxu0 0.0
    %280 = vmatprep.subr.mxu0 0.0
    %281 = vmatpush1.xpose.msra.mxu0 0.0
    %282 = vmatprep.subr.mxu0 0.0
    %283 = vmatpush1.xpose.msra.mxu0 0.0
    %284 = vmatprep.subr.mxu0 0.0
    %285 = vmatpush1.xpose.msra.mxu0 0.0
    %286 = vmatprep.subr.mxu0 0.0
    %287 = vmatpush1.xpose.msra.mxu0 0.0
    %288 = vmatprep.mubr.f32.mxu0 0.0
    %289 = vmatmul.mubr.f32.gmra.mrb[0].mxu0 %v220
    %v290 = vpop.f32.mrb[0].mxu0
    %v291 = vadd.f32 0.0, %v290
    %v292 = vpop.f32.mrb[0].mxu0
    %293 = vdwg.mxu0
    %v294 = vsel %vm142, %v214, -inf
    %295 = vmax.xlane.f32.xlu0 %v294
    %v296 = vpop.xlane.xlu0 %295
    %v297 = vsel %vm142, %v291, -inf
    %298 = vmax.xlane.f32.xlu0 %v297
    %v299 = vpop.xlane.xlu0 %298
    %v300 = vsub.f32 %v214, %v296
    %v301 = vsub.f32 %v291, %v299
    %v302 = vmul.f32 %v300, 1.442695
    %v303 = vpow.pop %v302
    %v304 = vmul.f32 %v301, 1.442695
    %v305 = vpow.pop %v304
    %v306 = vsel %vm142, %v303, 0.0
    %307 = vadd.xlane.f32.xlu0 %v306
    %v308 = vpop.xlane.xlu0 %307
    %v309 = vsel %vm142, %v305, 0.0
    %310 = vadd.xlane.f32.xlu0 %v309
    %v311 = vpop.xlane.xlu0 %310
    %v312 = vrcp.pop %v308
    %v313 = vrcp.pop %v311
    %v314 = vmul.f32 %v303, %v312
    %v315 = vmul.f32 %v305, %v313
    %316 = vrot.lane.b32.xlu0 %v125, 64
    %v317 = vpop.permute.xlu0 %316
    %v320 = vsel %vm142, %v314, 0
    %322 = vmatprep.subr.mxu0 0.0
    %323 = vmatpush1.msra.mxu0 %v317
    %324 = vmatprep.subr.mxu0 0.0
    %325 = vmatpush1.msra.mxu0 0.0
    %326 = vmatprep.subr.mxu0 0.0
    %327 = vmatpush1.msra.mxu0 0.0
    %328 = vmatprep.subr.mxu0 0.0
    %329 = vmatpush1.msra.mxu0 0.0
    %330 = vmatprep.subr.mxu0 0.0
    %331 = vmatpush1.msra.mxu0 0.0
    %332 = vmatprep.subr.mxu0 0.0
    %333 = vmatpush1.msra.mxu0 0.0
    %334 = vmatprep.subr.mxu0 0.0
    %335 = vmatpush1.msra.mxu0 0.0
    %336 = vmatprep.subr.mxu0 0.0
    %337 = vmatpush1.msra.mxu0 0.0
    %338 = vmatprep.subr.mxu0 0.0
    %339 = vmatpush1.msra.mxu0 0.0
    %340 = vmatprep.subr.mxu0 0.0
    %341 = vmatpush1.msra.mxu0 0.0
    %342 = vmatprep.subr.mxu0 0.0
    %343 = vmatpush1.msra.mxu0 0.0
    %344 = vmatprep.subr.mxu0 0.0
    %345 = vmatpush1.msra.mxu0 0.0
    %346 = vmatprep.subr.mxu0 0.0
    %347 = vmatpush1.msra.mxu0 0.0
    %348 = vmatprep.subr.mxu0 0.0
    %349 = vmatpush1.msra.mxu0 0.0
    %350 = vmatprep.subr.mxu0 0.0
    %351 = vmatpush1.msra.mxu0 0.0
    %352 = vmatprep.subr.mxu0 0.0
    %353 = vmatpush1.msra.mxu0 0.0
    %354 = vmatprep.subr.mxu0 0.0
    %355 = vmatpush1.msra.mxu0 0.0
    %356 = vmatprep.subr.mxu0 0.0
    %357 = vmatpush1.msra.mxu0 0.0
    %358 = vmatprep.subr.mxu0 0.0
    %359 = vmatpush1.msra.mxu0 0.0
    %360 = vmatprep.subr.mxu0 0.0
    %361 = vmatpush1.msra.mxu0 0.0
    %362 = vmatprep.subr.mxu0 0.0
    %363 = vmatpush1.msra.mxu0 0.0
    %364 = vmatprep.subr.mxu0 0.0
    %365 = vmatpush1.msra.mxu0 0.0
    %366 = vmatprep.subr.mxu0 0.0
    %367 = vmatpush1.msra.mxu0 0.0
    %368 = vmatprep.subr.mxu0 0.0
    %369 = vmatpush1.msra.mxu0 0.0
    %370 = vmatprep.subr.mxu0 0.0
    %371 = vmatpush1.msra.mxu0 0.0
    %372 = vmatprep.subr.mxu0 0.0
    %373 = vmatpush1.msra.mxu0 0.0
    %374 = vmatprep.subr.mxu0 0.0
    %375 = vmatpush1.msra.mxu0 0.0
    %376 = vmatprep.subr.mxu0 0.0
    %377 = vmatpush1.msra.mxu0 0.0
    %378 = vmatprep.subr.mxu0 0.0
    %379 = vmatpush1.msra.mxu0 0.0
    %380 = vmatprep.subr.mxu0 0.0
    %381 = vmatpush1.msra.mxu0 0.0
    %382 = vmatprep.subr.mxu0 0.0
    %383 = vmatpush1.msra.mxu0 0.0
    %384 = vmatprep.subr.mxu0 0.0
    %385 = vmatpush1.msra.mxu0 0.0
    %386 = vmatprep.mubr.f32.mxu0 0.0
    %387 = vmatmul.mubr.f32.gmra.mrb[0].mxu0 %v320
    %v388 = vpop.f32.mrb[0].mxu0
    %v389 = vadd.f32 0.0, %v388
    %v390 = vpop.f32.mrb[0].mxu0
    %391 = vdwg.mxu0
    %392 = vrot.lane.b32.xlu0 %v130, 64
    %v393 = vpop.permute.xlu0 %392
    %v396 = vsel %vm142, %v315, 0
    %398 = vmatprep.subr.mxu0 0.0
    %399 = vmatpush1.msra.mxu0 %v393
    %400 = vmatprep.subr.mxu0 0.0
    %401 = vmatpush1.msra.mxu0 0.0
    %402 = vmatprep.subr.mxu0 0.0
    %403 = vmatpush1.msra.mxu0 0.0
    %404 = vmatprep.subr.mxu0 0.0
    %405 = vmatpush1.msra.mxu0 0.0
    %406 = vmatprep.subr.mxu0 0.0
    %407 = vmatpush1.msra.mxu0 0.0
    %408 = vmatprep.subr.mxu0 0.0
    %409 = vmatpush1.msra.mxu0 0.0
    %410 = vmatprep.subr.mxu0 0.0
    %411 = vmatpush1.msra.mxu0 0.0
    %412 = vmatprep.subr.mxu0 0.0
    %413 = vmatpush1.msra.mxu0 0.0
    %414 = vmatprep.subr.mxu0 0.0
    %415 = vmatpush1.msra.mxu0 0.0
    %416 = vmatprep.subr.mxu0 0.0
    %417 = vmatpush1.msra.mxu0 0.0
    %418 = vmatprep.subr.mxu0 0.0
    %419 = vmatpush1.msra.mxu0 0.0
    %420 = vmatprep.subr.mxu0 0.0
    %421 = vmatpush1.msra.mxu0 0.0
    %422 = vmatprep.subr.mxu0 0.0
    %423 = vmatpush1.msra.mxu0 0.0
    %424 = vmatprep.subr.mxu0 0.0
    %425 = vmatpush1.msra.mxu0 0.0
    %426 = vmatprep.subr.mxu0 0.0
    %427 = vmatpush1.msra.mxu0 0.0
    %428 = vmatprep.subr.mxu0 0.0
    %429 = vmatpush1.msra.mxu0 0.0
    %430 = vmatprep.subr.mxu0 0.0
    %431 = vmatpush1.msra.mxu0 0.0
    %432 = vmatprep.subr.mxu0 0.0
    %433 = vmatpush1.msra.mxu0 0.0
    %434 = vmatprep.subr.mxu0 0.0
    %435 = vmatpush1.msra.mxu0 0.0
    %436 = vmatprep.subr.mxu0 0.0
    %437 = vmatpush1.msra.mxu0 0.0
    %438 = vmatprep.subr.mxu0 0.0
    %439 = vmatpush1.msra.mxu0 0.0
    %440 = vmatprep.subr.mxu0 0.0
    %441 = vmatpush1.msra.mxu0 0.0
    %442 = vmatprep.subr.mxu0 0.0
    %443 = vmatpush1.msra.mxu0 0.0
    %444 = vmatprep.subr.mxu0 0.0
    %445 = vmatpush1.msra.mxu0 0.0
    %446 = vmatprep.subr.mxu0 0.0
    %447 = vmatpush1.msra.mxu0 0.0
    %448 = vmatprep.subr.mxu0 0.0
    %449 = vmatpush1.msra.mxu0 0.0
    %450 = vmatprep.subr.mxu0 0.0
    %451 = vmatpush1.msra.mxu0 0.0
    %452 = vmatprep.subr.mxu0 0.0
    %453 = vmatpush1.msra.mxu0 0.0
    %454 = vmatprep.subr.mxu0 0.0
    %455 = vmatpush1.msra.mxu0 0.0
    %456 = vmatprep.subr.mxu0 0.0
    %457 = vmatpush1.msra.mxu0 0.0
    %458 = vmatprep.subr.mxu0 0.0
    %459 = vmatpush1.msra.mxu0 0.0
    %460 = vmatprep.subr.mxu0 0.0
    %461 = vmatpush1.msra.mxu0 0.0
    %462 = vmatprep.mubr.f32.mxu0 0.0
    %463 = vmatmul.mubr.f32.gmra.mrb[0].mxu0 %v396
    %v464 = vpop.f32.mrb[0].mxu0
    %v465 = vadd.f32 0.0, %v464
    %v466 = vpop.f32.mrb[0].mxu0
    %467 = vdwg.mxu0
    %v468 = vld [vmem:[#allocation5 + $0x20] sm:$0xff]
    %v470 = vsel %vm142, %v389, 0
    %v473 = vsel %vm142, %v465, 0
    %475 = vmatprep.subr.mxu0 0.0
    %476 = vmatpush1.msra.mxu0 %v468
    %477 = vmatprep.subr.mxu0 0.0
    %478 = vmatpush1.msra.mxu0 0.0
    %479 = vmatprep.subr.mxu0 0.0
    %480 = vmatpush1.msra.mxu0 0.0
    %481 = vmatprep.subr.mxu0 0.0
    %482 = vmatpush1.msra.mxu0 0.0
    %483 = vmatprep.subr.mxu0 0.0
    %484 = vmatpush1.msra.mxu0 0.0
    %485 = vmatprep.subr.mxu0 0.0
    %486 = vmatpush1.msra.mxu0 0.0
    %487 = vmatprep.subr.mxu0 0.0
    %488 = vmatpush1.msra.mxu0 0.0
    %489 = vmatprep.subr.mxu0 0.0
    %490 = vmatpush1.msra.mxu0 0.0
    %491 = vmatprep.subr.mxu0 0.0
    %492 = vmatpush1.msra.mxu0 0.0
    %493 = vmatprep.subr.mxu0 0.0
    %494 = vmatpush1.msra.mxu0 0.0
    %495 = vmatprep.subr.mxu0 0.0
    %496 = vmatpush1.msra.mxu0 0.0
    %497 = vmatprep.subr.mxu0 0.0
    %498 = vmatpush1.msra.mxu0 0.0
    %499 = vmatprep.subr.mxu0 0.0
    %500 = vmatpush1.msra.mxu0 0.0
    %501 = vmatprep.subr.mxu0 0.0
    %502 = vmatpush1.msra.mxu0 0.0
    %503 = vmatprep.subr.mxu0 0.0
    %504 = vmatpush1.msra.mxu0 0.0
    %505 = vmatprep.subr.mxu0 0.0
    %506 = vmatpush1.msra.mxu0 0.0
    %507 = vmatprep.subr.mxu0 0.0
    %508 = vmatpush1.msra.mxu0 0.0
    %509 = vmatprep.subr.mxu0 0.0
    %510 = vmatpush1.msra.mxu0 0.0
    %511 = vmatprep.subr.mxu0 0.0
    %512 = vmatpush1.msra.mxu0 0.0
    %513 = vmatprep.subr.mxu0 0.0
    %514 = vmatpush1.msra.mxu0 0.0
    %515 = vmatprep.subr.mxu0 0.0
    %516 = vmatpush1.msra.mxu0 0.0
    %517 = vmatprep.subr.mxu0 0.0
    %518 = vmatpush1.msra.mxu0 0.0
    %519 = vmatprep.subr.mxu0 0.0
    %520 = vmatpush1.msra.mxu0 0.0
    %521 = vmatprep.subr.mxu0 0.0
    %522 = vmatpush1.msra.mxu0 0.0
    %523 = vmatprep.subr.mxu0 0.0
    %524 = vmatpush1.msra.mxu0 0.0
    %525 = vmatprep.subr.mxu0 0.0
    %526 = vmatpush1.msra.mxu0 0.0
    %527 = vmatprep.subr.mxu0 0.0
    %528 = vmatpush1.msra.mxu0 0.0
    %529 = vmatprep.subr.mxu0 0.0
    %530 = vmatpush1.msra.mxu0 0.0
    %531 = vmatprep.subr.mxu0 0.0
    %532 = vmatpush1.msra.mxu0 0.0
    %533 = vmatprep.subr.mxu0 0.0
    %534 = vmatpush1.msra.mxu0 0.0
    %535 = vmatprep.subr.mxu0 0.0
    %536 = vmatpush1.msra.mxu0 0.0
    %537 = vmatprep.subr.mxu0 0.0
    %538 = vmatpush1.msra.mxu0 0.0
    %539 = vmatprep.mubr.f32.mxu0 0.0
    %540 = vmatmul.mubr.f32.gmra.mrb[0].mxu0 %v470
    %v541 = vpop.f32.mrb[0].mxu0
    %v542 = vadd.f32 0.0, %v541
    %v543 = vpop.f32.mrb[0].mxu0
    %544 = vmatprep.mubr.f32.mxu0 0.0
    %545 = vmatmul.mubr.f32.gmra.mrb[0].mxu0 %v473
    %v546 = vpop.f32.mrb[0].mxu0
    %v547 = vadd.f32 0.0, %v546
    %v548 = vpop.f32.mrb[0].mxu0
    %549 = vdwg.mxu0
    %v550 = vadd.f32 %v137, %v542
    %v551 = vadd.f32 %v138, %v547
    %552 = vrot.lane.b32.xlu0 %v125, 120
    %v553 = vpop.permute.xlu0 %552
    %554 = vrot.lane.b32.xlu0 %v125, 88
    %v555 = vpop.permute.xlu0 %554
    %v556 = vsel %vm142, %v553, 0
    %v558 = vsel %vm142, %v555, 0
    %560 = vmatprep.subr.mxu0 0.0
    %561 = vmatpush1.xpose.msra.mxu0 %v558
    %562 = vmatprep.subr.mxu0 0.0
    %563 = vmatpush1.xpose.msra.mxu0 0.0
    %564 = vmatprep.subr.mxu0 0.0
    %565 = vmatpush1.xpose.msra.mxu0 0.0
    %566 = vmatprep.subr.mxu0 0.0
    %567 = vmatpush1.xpose.msra.mxu0 0.0
    %568 = vmatprep.subr.mxu0 0.0
    %569 = vmatpush1.xpose.msra.mxu0 0.0
    %570 = vmatprep.subr.mxu0 0.0
    %571 = vmatpush1.xpose.msra.mxu0 0.0
    %572 = vmatprep.subr.mxu0 0.0
    %573 = vmatpush1.xpose.msra.mxu0 0.0
    %574 = vmatprep.subr.mxu0 0.0
    %575 = vmatpush1.xpose.msra.mxu0 0.0
    %576 = vmatprep.subr.mxu0 0.0
    %577 = vmatpush1.xpose.msra.mxu0 0.0
    %578 = vmatprep.subr.mxu0 0.0
    %579 = vmatpush1.xpose.msra.mxu0 0.0
    %580 = vmatprep.subr.mxu0 0.0
    %581 = vmatpush1.xpose.msra.mxu0 0.0
    %582 = vmatprep.subr.mxu0 0.0
    %583 = vmatpush1.xpose.msra.mxu0 0.0
    %584 = vmatprep.subr.mxu0 0.0
    %585 = vmatpush1.xpose.msra.mxu0 0.0
    %586 = vmatprep.subr.mxu0 0.0
    %587 = vmatpush1.xpose.msra.mxu0 0.0
    %588 = vmatprep.subr.mxu0 0.0
    %589 = vmatpush1.xpose.msra.mxu0 0.0
    %590 = vmatprep.subr.mxu0 0.0
    %591 = vmatpush1.xpose.msra.mxu0 0.0
    %592 = vmatprep.subr.mxu0 0.0
    %593 = vmatpush1.xpose.msra.mxu0 0.0
    %594 = vmatprep.subr.mxu0 0.0
    %595 = vmatpush1.xpose.msra.mxu0 0.0
    %596 = vmatprep.subr.mxu0 0.0
    %597 = vmatpush1.xpose.msra.mxu0 0.0
    %598 = vmatprep.subr.mxu0 0.0
    %599 = vmatpush1.xpose.msra.mxu0 0.0
    %600 = vmatprep.subr.mxu0 0.0
    %601 = vmatpush1.xpose.msra.mxu0 0.0
    %602 = vmatprep.subr.mxu0 0.0
    %603 = vmatpush1.xpose.msra.mxu0 0.0
    %604 = vmatprep.subr.mxu0 0.0
    %605 = vmatpush1.xpose.msra.mxu0 0.0
    %606 = vmatprep.subr.mxu0 0.0
    %607 = vmatpush1.xpose.msra.mxu0 0.0
    %608 = vmatprep.subr.mxu0 0.0
    %609 = vmatpush1.xpose.msra.mxu0 0.0
    %610 = vmatprep.subr.mxu0 0.0
    %611 = vmatpush1.xpose.msra.mxu0 0.0
    %612 = vmatprep.subr.mxu0 0.0
    %613 = vmatpush1.xpose.msra.mxu0 0.0
    %614 = vmatprep.subr.mxu0 0.0
    %615 = vmatpush1.xpose.msra.mxu0 0.0
    %616 = vmatprep.subr.mxu0 0.0
    %617 = vmatpush1.xpose.msra.mxu0 0.0
    %618 = vmatprep.subr.mxu0 0.0
    %619 = vmatpush1.xpose.msra.mxu0 0.0
    %620 = vmatprep.subr.mxu0 0.0
    %621 = vmatpush1.xpose.msra.mxu0 0.0
    %622 = vmatprep.subr.mxu0 0.0
    %623 = vmatpush1.xpose.msra.mxu0 0.0
    %624 = vmatprep.mubr.f32.mxu0 0.0
    %625 = vmatmul.mubr.f32.gmra.mrb[0].mxu0 %v556
    %v626 = vpop.f32.mrb[0].mxu0
    %v627 = vadd.f32 0.0, %v626
    %v628 = vpop.f32.mrb[0].mxu0
    %629 = vdwg.mxu0
    %630 = vrot.lane.b32.xlu0 %v130, 120
    %v631 = vpop.permute.xlu0 %630
    %632 = vrot.lane.b32.xlu0 %v130, 88
    %v633 = vpop.permute.xlu0 %632
    %v634 = vsel %vm142, %v631, 0
    %v636 = vsel %vm142, %v633, 0
    %638 = vmatprep.subr.mxu0 0.0
    %639 = vmatpush1.xpose.msra.mxu0 %v636
    %640 = vmatprep.subr.mxu0 0.0
    %641 = vmatpush1.xpose.msra.mxu0 0.0
    %642 = vmatprep.subr.mxu0 0.0
    %643 = vmatpush1.xpose.msra.mxu0 0.0
    %644 = vmatprep.subr.mxu0 0.0
    %645 = vmatpush1.xpose.msra.mxu0 0.0
    %646 = vmatprep.subr.mxu0 0.0
    %647 = vmatpush1.xpose.msra.mxu0 0.0
    %648 = vmatprep.subr.mxu0 0.0
    %649 = vmatpush1.xpose.msra.mxu0 0.0
    %650 = vmatprep.subr.mxu0 0.0
    %651 = vmatpush1.xpose.msra.mxu0 0.0
    %652 = vmatprep.subr.mxu0 0.0
    %653 = vmatpush1.xpose.msra.mxu0 0.0
    %654 = vmatprep.subr.mxu0 0.0
    %655 = vmatpush1.xpose.msra.mxu0 0.0
    %656 = vmatprep.subr.mxu0 0.0
    %657 = vmatpush1.xpose.msra.mxu0 0.0
    %658 = vmatprep.subr.mxu0 0.0
    %659 = vmatpush1.xpose.msra.mxu0 0.0
    %660 = vmatprep.subr.mxu0 0.0
    %661 = vmatpush1.xpose.msra.mxu0 0.0
    %662 = vmatprep.subr.mxu0 0.0
    %663 = vmatpush1.xpose.msra.mxu0 0.0
    %664 = vmatprep.subr.mxu0 0.0
    %665 = vmatpush1.xpose.msra.mxu0 0.0
    %666 = vmatprep.subr.mxu0 0.0
    %667 = vmatpush1.xpose.msra.mxu0 0.0
    %668 = vmatprep.subr.mxu0 0.0
    %669 = vmatpush1.xpose.msra.mxu0 0.0
    %670 = vmatprep.subr.mxu0 0.0
    %671 = vmatpush1.xpose.msra.mxu0 0.0
    %672 = vmatprep.subr.mxu0 0.0
    %673 = vmatpush1.xpose.msra.mxu0 0.0
    %674 = vmatprep.subr.mxu0 0.0
    %675 = vmatpush1.xpose.msra.mxu0 0.0
    %676 = vmatprep.subr.mxu0 0.0
    %677 = vmatpush1.xpose.msra.mxu0 0.0
    %678 = vmatprep.subr.mxu0 0.0
    %679 = vmatpush1.xpose.msra.mxu0 0.0
    %680 = vmatprep.subr.mxu0 0.0
    %681 = vmatpush1.xpose.msra.mxu0 0.0
    %682 = vmatprep.subr.mxu0 0.0
    %683 = vmatpush1.xpose.msra.mxu0 0.0
    %684 = vmatprep.subr.mxu0 0.0
    %685 = vmatpush1.xpose.msra.mxu0 0.0
    %686 = vmatprep.subr.mxu0 0.0
    %687 = vmatpush1.xpose.msra.mxu0 0.0
    %688 = vmatprep.subr.mxu0 0.0
    %689 = vmatpush1.xpose.msra.mxu0 0.0
    %690 = vmatprep.subr.mxu0 0.0
    %691 = vmatpush1.xpose.msra.mxu0 0.0
    %692 = vmatprep.subr.mxu0 0.0
    %693 = vmatpush1.xpose.msra.mxu0 0.0
    %694 = vmatprep.subr.mxu0 0.0
    %695 = vmatpush1.xpose.msra.mxu0 0.0
    %696 = vmatprep.subr.mxu0 0.0
    %697 = vmatpush1.xpose.msra.mxu0 0.0
    %698 = vmatprep.subr.mxu0 0.0
    %699 = vmatpush1.xpose.msra.mxu0 0.0
    %700 = vmatprep.subr.mxu0 0.0
    %701 = vmatpush1.xpose.msra.mxu0 0.0
    %702 = vmatprep.mubr.f32.mxu0 0.0
    %703 = vmatmul.mubr.f32.gmra.mrb[0].mxu0 %v634
    %v704 = vpop.f32.mrb[0].mxu0
    %v705 = vadd.f32 0.0, %v704
    %v706 = vpop.f32.mrb[0].mxu0
    %707 = vdwg.mxu0
    %v708 = vsel %vm142, %v627, -inf
    %709 = vmax.xlane.f32.xlu0 %v708
    %v710 = vpop.xlane.xlu0 %709
    %v711 = vsel %vm142, %v705, -inf
    %712 = vmax.xlane.f32.xlu0 %v711
    %v713 = vpop.xlane.xlu0 %712
    %v714 = vsub.f32 %v627, %v710
    %v715 = vsub.f32 %v705, %v713
    %v716 = vmul.f32 %v714, 1.442695
    %v717 = vpow.pop %v716
    %v718 = vmul.f32 %v715, 1.442695
    %v719 = vpow.pop %v718
    %v720 = vsel %vm142, %v717, 0.0
    %721 = vadd.xlane.f32.xlu0 %v720
    %v722 = vpop.xlane.xlu0 %721
    %v723 = vsel %vm142, %v719, 0.0
    %724 = vadd.xlane.f32.xlu0 %v723
    %v725 = vpop.xlane.xlu0 %724
    %v726 = vrcp.pop %v722
    %v727 = vrcp.pop %v725
    %v728 = vmul.f32 %v717, %v726
    %v729 = vmul.f32 %v719, %v727
    %730 = vrot.lane.b32.xlu0 %v125, 56
    %v731 = vpop.permute.xlu0 %730
    %v734 = vsel %vm142, %v728, 0
    %736 = vmatprep.subr.mxu0 0.0
    %737 = vmatpush1.msra.mxu0 %v731
    %738 = vmatprep.subr.mxu0 0.0
    %739 = vmatpush1.msra.mxu0 0.0
    %740 = vmatprep.subr.mxu0 0.0
    %741 = vmatpush1.msra.mxu0 0.0
    %742 = vmatprep.subr.mxu0 0.0
    %743 = vmatpush1.msra.mxu0 0.0
    %744 = vmatprep.subr.mxu0 0.0
    %745 = vmatpush1.msra.mxu0 0.0
    %746 = vmatprep.subr.mxu0 0.0
    %747 = vmatpush1.msra.mxu0 0.0
    %748 = vmatprep.subr.mxu0 0.0
    %749 = vmatpush1.msra.mxu0 0.0
    %750 = vmatprep.subr.mxu0 0.0
    %751 = vmatpush1.msra.mxu0 0.0
    %752 = vmatprep.subr.mxu0 0.0
    %753 = vmatpush1.msra.mxu0 0.0
    %754 = vmatprep.subr.mxu0 0.0
    %755 = vmatpush1.msra.mxu0 0.0
    %756 = vmatprep.subr.mxu0 0.0
    %757 = vmatpush1.msra.mxu0 0.0
    %758 = vmatprep.subr.mxu0 0.0
    %759 = vmatpush1.msra.mxu0 0.0
    %760 = vmatprep.subr.mxu0 0.0
    %761 = vmatpush1.msra.mxu0 0.0
    %762 = vmatprep.subr.mxu0 0.0
    %763 = vmatpush1.msra.mxu0 0.0
    %764 = vmatprep.subr.mxu0 0.0
    %765 = vmatpush1.msra.mxu0 0.0
    %766 = vmatprep.subr.mxu0 0.0
    %767 = vmatpush1.msra.mxu0 0.0
    %768 = vmatprep.subr.mxu0 0.0
    %769 = vmatpush1.msra.mxu0 0.0
    %770 = vmatprep.subr.mxu0 0.0
    %771 = vmatpush1.msra.mxu0 0.0
    %772 = vmatprep.subr.mxu0 0.0
    %773 = vmatpush1.msra.mxu0 0.0
    %774 = vmatprep.subr.mxu0 0.0
    %775 = vmatpush1.msra.mxu0 0.0
    %776 = vmatprep.subr.mxu0 0.0
    %777 = vmatpush1.msra.mxu0 0.0
    %778 = vmatprep.subr.mxu0 0.0
    %779 = vmatpush1.msra.mxu0 0.0
    %780 = vmatprep.subr.mxu0 0.0
    %781 = vmatpush1.msra.mxu0 0.0
    %782 = vmatprep.subr.mxu0 0.0
    %783 = vmatpush1.msra.mxu0 0.0
    %784 = vmatprep.subr.mxu0 0.0
    %785 = vmatpush1.msra.mxu0 0.0
    %786 = vmatprep.subr.mxu0 0.0
    %787 = vmatpush1.msra.mxu0 0.0
    %788 = vmatprep.subr.mxu0 0.0
    %789 = vmatpush1.msra.mxu0 0.0
    %790 = vmatprep.subr.mxu0 0.0
    %791 = vmatpush1.msra.mxu0 0.0
    %792 = vmatprep.subr.mxu0 0.0
    %793 = vmatpush1.msra.mxu0 0.0
    %794 = vmatprep.subr.mxu0 0.0
    %795 = vmatpush1.msra.mxu0 0.0
    %796 = vmatprep.subr.mxu0 0.0
    %797 = vmatpush1.msra.mxu0 0.0
    %798 = vmatprep.subr.mxu0 0.0
    %799 = vmatpush1.msra.mxu0 0.0
    %800 = vmatprep.mubr.f32.mxu0 0.0
    %801 = vmatmul.mubr.f32.gmra.mrb[0].mxu0 %v734
    %v802 = vpop.f32.mrb[0].mxu0
    %v803 = vadd.f32 0.0, %v802
    %v804 = vpop.f32.mrb[0].mxu0
    %805 = vdwg.mxu0
    %806 = vrot.lane.b32.xlu0 %v130, 56
    %v807 = vpop.permute.xlu0 %806
    %v810 = vsel %vm142, %v729, 0
    %812 = vmatprep.subr.mxu0 0.0
    %813 = vmatpush1.msra.mxu0 %v807
    %814 = vmatprep.subr.mxu0 0.0
    %815 = vmatpush1.msra.mxu0 0.0
    %816 = vmatprep.subr.mxu0 0.0
    %817 = vmatpush1.msra.mxu0 0.0
    %818 = vmatprep.subr.mxu0 0.0
    %819 = vmatpush1.msra.mxu0 0.0
    %820 = vmatprep.subr.mxu0 0.0
    %821 = vmatpush1.msra.mxu0 0.0
    %822 = vmatprep.subr.mxu0 0.0
    %823 = vmatpush1.msra.mxu0 0.0
    %824 = vmatprep.subr.mxu0 0.0
    %825 = vmatpush1.msra.mxu0 0.0
    %826 = vmatprep.subr.mxu0 0.0
    %827 = vmatpush1.msra.mxu0 0.0
    %828 = vmatprep.subr.mxu0 0.0
    %829 = vmatpush1.msra.mxu0 0.0
    %830 = vmatprep.subr.mxu0 0.0
    %831 = vmatpush1.msra.mxu0 0.0
    %832 = vmatprep.subr.mxu0 0.0
    %833 = vmatpush1.msra.mxu0 0.0
    %834 = vmatprep.subr.mxu0 0.0
    %835 = vmatpush1.msra.mxu0 0.0
    %836 = vmatprep.subr.mxu0 0.0
    %837 = vmatpush1.msra.mxu0 0.0
    %838 = vmatprep.subr.mxu0 0.0
    %839 = vmatpush1.msra.mxu0 0.0
    %840 = vmatprep.subr.mxu0 0.0
    %841 = vmatpush1.msra.mxu0 0.0
    %842 = vmatprep.subr.mxu0 0.0
    %843 = vmatpush1.msra.mxu0 0.0
    %844 = vmatprep.subr.mxu0 0.0
    %845 = vmatpush1.msra.mxu0 0.0
    %846 = vmatprep.subr.mxu0 0.0
    %847 = vmatpush1.msra.mxu0 0.0
    %848 = vmatprep.subr.mxu0 0.0
    %849 = vmatpush1.msra.mxu0 0.0
    %850 = vmatprep.subr.mxu0 0.0
    %851 = vmatpush1.msra.mxu0 0.0
    %852 = vmatprep.subr.mxu0 0.0
    %853 = vmatpush1.msra.mxu0 0.0
    %854 = vmatprep.subr.mxu0 0.0
    %855 = vmatpush1.msra.mxu0 0.0
    %856 = vmatprep.subr.mxu0 0.0
    %857 = vmatpush1.msra.mxu0 0.0
    %858 = vmatprep.subr.mxu0 0.0
    %859 = vmatpush1.msra.mxu0 0.0
    %860 = vmatprep.subr.mxu0 0.0
    %861 = vmatpush1.msra.mxu0 0.0
    %862 = vmatprep.subr.mxu0 0.0
    %863 = vmatpush1.msra.mxu0 0.0
    %864 = vmatprep.subr.mxu0 0.0
    %865 = vmatpush1.msra.mxu0 0.0
    %866 = vmatprep.subr.mxu0 0.0
    %867 = vmatpush1.msra.mxu0 0.0
    %868 = vmatprep.subr.mxu0 0.0
    %869 = vmatpush1.msra.mxu0 0.0
    %870 = vmatprep.subr.mxu0 0.0
    %871 = vmatpush1.msra.mxu0 0.0
    %872 = vmatprep.subr.mxu0 0.0
    %873 = vmatpush1.msra.mxu0 0.0
    %874 = vmatprep.subr.mxu0 0.0
    %875 = vmatpush1.msra.mxu0 0.0
    %876 = vmatprep.mubr.f32.mxu0 0.0
    %877 = vmatmul.mubr.f32.gmra.mrb[0].mxu0 %v810
    %v878 = vpop.f32.mrb[0].mxu0
    %v879 = vadd.f32 0.0, %v878
    %v880 = vpop.f32.mrb[0].mxu0
    %881 = vdwg.mxu0
    %v882 = vld [vmem:[#allocation5 + $0x28] sm:$0xff]
    %v884 = vsel %vm142, %v803, 0
    %v887 = vsel %vm142, %v879, 0
    %889 = vmatprep.subr.mxu0 0.0
    %890 = vmatpush1.msra.mxu0 %v882
    %891 = vmatprep.subr.mxu0 0.0
    %892 = vmatpush1.msra.mxu0 0.0
    %893 = vmatprep.subr.mxu0 0.0
    %894 = vmatpush1.msra.mxu0 0.0
    %895 = vmatprep.subr.mxu0 0.0
    %896 = vmatpush1.msra.mxu0 0.0
    %897 = vmatprep.subr.mxu0 0.0
    %898 = vmatpush1.msra.mxu0 0.0
    %899 = vmatprep.subr.mxu0 0.0
    %900 = vmatpush1.msra.mxu0 0.0
    %901 = vmatprep.subr.mxu0 0.0
    %902 = vmatpush1.msra.mxu0 0.0
    %903 = vmatprep.subr.mxu0 0.0
    %904 = vmatpush1.msra.mxu0 0.0
    %905 = vmatprep.subr.mxu0 0.0
    %906 = vmatpush1.msra.mxu0 0.0
    %907 = vmatprep.subr.mxu0 0.0
    %908 = vmatpush1.msra.mxu0 0.0
    %909 = vmatprep.subr.mxu0 0.0
    %910 = vmatpush1.msra.mxu0 0.0
    %911 = vmatprep.subr.mxu0 0.0
    %912 = vmatpush1.msra.mxu0 0.0
    %913 = vmatprep.subr.mxu0 0.0
    %914 = vmatpush1.msra.mxu0 0.0
    %915 = vmatprep.subr.mxu0 0.0
    %916 = vmatpush1.msra.mxu0 0.0
    %917 = vmatprep.subr.mxu0 0.0
    %918 = vmatpush1.msra.mxu0 0.0
    %919 = vmatprep.subr.mxu0 0.0
    %920 = vmatpush1.msra.mxu0 0.0
    %921 = vmatprep.subr.mxu0 0.0
    %922 = vmatpush1.msra.mxu0 0.0
    %923 = vmatprep.subr.mxu0 0.0
    %924 = vmatpush1.msra.mxu0 0.0
    %925 = vmatprep.subr.mxu0 0.0
    %926 = vmatpush1.msra.mxu0 0.0
    %927 = vmatprep.subr.mxu0 0.0
    %928 = vmatpush1.msra.mxu0 0.0
    %929 = vmatprep.subr.mxu0 0.0
    %930 = vmatpush1.msra.mxu0 0.0
    %931 = vmatprep.subr.mxu0 0.0
    %932 = vmatpush1.msra.mxu0 0.0
    %933 = vmatprep.subr.mxu0 0.0
    %934 = vmatpush1.msra.mxu0 0.0
    %935 = vmatprep.subr.mxu0 0.0
    %936 = vmatpush1.msra.mxu0 0.0
    %937 = vmatprep.subr.mxu0 0.0
    %938 = vmatpush1.msra.mxu0 0.0
    %939 = vmatprep.subr.mxu0 0.0
    %940 = vmatpush1.msra.mxu0 0.0
    %941 = vmatprep.subr.mxu0 0.0
    %942 = vmatpush1.msra.mxu0 0.0
    %943 = vmatprep.subr.mxu0 0.0
    %944 = vmatpush1.msra.mxu0 0.0
    %945 = vmatprep.subr.mxu0 0.0
    %946 = vmatpush1.msra.mxu0 0.0
    %947 = vmatprep.subr.mxu0 0.0
    %948 = vmatpush1.msra.mxu0 0.0
    %949 = vmatprep.subr.mxu0 0.0
    %950 = vmatpush1.msra.mxu0 0.0
    %951 = vmatprep.subr.mxu0 0.0
    %952 = vmatpush1.msra.mxu0 0.0
    %953 = vmatprep.mubr.f32.mxu0 0.0
    %954 = vmatmul.mubr.f32.gmra.mrb[0].mxu0 %v884
    %v955 = vpop.f32.mrb[0].mxu0
    %v956 = vadd.f32 0.0, %v955
    %v957 = vpop.f32.mrb[0].mxu0
    %958 = vmatprep.mubr.f32.mxu0 0.0
    %959 = vmatmul.mubr.f32.gmra.mrb[0].mxu0 %v887
    %v960 = vpop.f32.mrb[0].mxu0
    %v961 = vadd.f32 0.0, %v960
    %v962 = vpop.f32.mrb[0].mxu0
    %963 = vdwg.mxu0
    %v964 = vadd.f32 %v550, %v956
    %v965 = vadd.f32 %v551, %v961
    %966 = vrot.lane.b32.xlu0 %v125, 112
    %v967 = vpop.permute.xlu0 %966
    %968 = vrot.lane.b32.xlu0 %v125, 80
    %v969 = vpop.permute.xlu0 %968
    %v970 = vsel %vm142, %v967, 0
    %v972 = vsel %vm142, %v969, 0
    %974 = vmatprep.subr.mxu0 0.0
    %975 = vmatpush1.xpose.msra.mxu0 %v972
    %976 = vmatprep.subr.mxu0 0.0
    %977 = vmatpush1.xpose.msra.mxu0 0.0
    %978 = vmatprep.subr.mxu0 0.0
    %979 = vmatpush1.xpose.msra.mxu0 0.0
    %980 = vmatprep.subr.mxu0 0.0
    %981 = vmatpush1.xpose.msra.mxu0 0.0
    %982 = vmatprep.subr.mxu0 0.0
    %983 = vmatpush1.xpose.msra.mxu0 0.0
    %984 = vmatprep.subr.mxu0 0.0
    %985 = vmatpush1.xpose.msra.mxu0 0.0
    %986 = vmatprep.subr.mxu0 0.0
    %987 = vmatpush1.xpose.msra.mxu0 0.0
    %988 = vmatprep.subr.mxu0 0.0
    %989 = vmatpush1.xpose.msra.mxu0 0.0
    %990 = vmatprep.subr.mxu0 0.0
    %991 = vmatpush1.xpose.msra.mxu0 0.0
    %992 = vmatprep.subr.mxu0 0.0
    %993 = vmatpush1.xpose.msra.mxu0 0.0
    %994 = vmatprep.subr.mxu0 0.0
    %995 = vmatpush1.xpose.msra.mxu0 0.0
    %996 = vmatprep.subr.mxu0 0.0
    %997 = vmatpush1.xpose.msra.mxu0 0.0
    %998 = vmatprep.subr.mxu0 0.0
    %999 = vmatpush1.xpose.msra.mxu0 0.0
    %1000 = vmatprep.subr.mxu0 0.0
    %1001 = vmatpush1.xpose.msra.mxu0 0.0
    %1002 = vmatprep.subr.mxu0 0.0
    %1003 = vmatpush1.xpose.msra.mxu0 0.0
    %1004 = vmatprep.subr.mxu0 0.0
    %1005 = vmatpush1.xpose.msra.mxu0 0.0
    %1006 = vmatprep.subr.mxu0 0.0
    %1007 = vmatpush1.xpose.msra.mxu0 0.0
    %1008 = vmatprep.subr.mxu0 0.0
    %1009 = vmatpush1.xpose.msra.mxu0 0.0
    %1010 = vmatprep.subr.mxu0 0.0
    %1011 = vmatpush1.xpose.msra.mxu0 0.0
    %1012 = vmatprep.subr.mxu0 0.0
    %1013 = vmatpush1.xpose.msra.mxu0 0.0
    %1014 = vmatprep.subr.mxu0 0.0
    %1015 = vmatpush1.xpose.msra.mxu0 0.0
    %1016 = vmatprep.subr.mxu0 0.0
    %1017 = vmatpush1.xpose.msra.mxu0 0.0
    %1018 = vmatprep.subr.mxu0 0.0
    %1019 = vmatpush1.xpose.msra.mxu0 0.0
    %1020 = vmatprep.subr.mxu0 0.0
    %1021 = vmatpush1.xpose.msra.mxu0 0.0
    %1022 = vmatprep.subr.mxu0 0.0
    %1023 = vmatpush1.xpose.msra.mxu0 0.0
    %1024 = vmatprep.subr.mxu0 0.0
    %1025 = vmatpush1.xpose.msra.mxu0 0.0
    %1026 = vmatprep.subr.mxu0 0.0
    %1027 = vmatpush1.xpose.msra.mxu0 0.0
    %1028 = vmatprep.subr.mxu0 0.0
    %1029 = vmatpush1.xpose.msra.mxu0 0.0
    %1030 = vmatprep.subr.mxu0 0.0
    %1031 = vmatpush1.xpose.msra.mxu0 0.0
    %1032 = vmatprep.subr.mxu0 0.0
    %1033 = vmatpush1.xpose.msra.mxu0 0.0
    %1034 = vmatprep.subr.mxu0 0.0
    %1035 = vmatpush1.xpose.msra.mxu0 0.0
    %1036 = vmatprep.subr.mxu0 0.0
    %1037 = vmatpush1.xpose.msra.mxu0 0.0
    %1038 = vmatprep.mubr.f32.mxu0 0.0
    %1039 = vmatmul.mubr.f32.gmra.mrb[0].mxu0 %v970
    %v1040 = vpop.f32.mrb[0].mxu0
    %v1041 = vadd.f32 0.0, %v1040
    %v1042 = vpop.f32.mrb[0].mxu0
    %1043 = vdwg.mxu0
    %1044 = vrot.lane.b32.xlu0 %v130, 112
    %v1045 = vpop.permute.xlu0 %1044
    %1046 = vrot.lane.b32.xlu0 %v130, 80
    %v1047 = vpop.permute.xlu0 %1046
    %v1048 = vsel %vm142, %v1045, 0
    %v1050 = vsel %vm142, %v1047, 0
    %1052 = vmatprep.subr.mxu0 0.0
    %1053 = vmatpush1.xpose.msra.mxu0 %v1050
    %1054 = vmatprep.subr.mxu0 0.0
    %1055 = vmatpush1.xpose.msra.mxu0 0.0
    %1056 = vmatprep.subr.mxu0 0.0
    %1057 = vmatpush1.xpose.msra.mxu0 0.0
    %1058 = vmatprep.subr.mxu0 0.0
    %1059 = vmatpush1.xpose.msra.mxu0 0.0
    %1060 = vmatprep.subr.mxu0 0.0
    %1061 = vmatpush1.xpose.msra.mxu0 0.0
    %1062 = vmatprep.subr.mxu0 0.0
    %1063 = vmatpush1.xpose.msra.mxu0 0.0
    %1064 = vmatprep.subr.mxu0 0.0
    %1065 = vmatpush1.xpose.msra.mxu0 0.0
    %1066 = vmatprep.subr.mxu0 0.0
    %1067 = vmatpush1.xpose.msra.mxu0 0.0
    %1068 = vmatprep.subr.mxu0 0.0
    %1069 = vmatpush1.xpose.msra.mxu0 0.0
    %1070 = vmatprep.subr.mxu0 0.0
    %1071 = vmatpush1.xpose.msra.mxu0 0.0
    %1072 = vmatprep.subr.mxu0 0.0
    %1073 = vmatpush1.xpose.msra.mxu0 0.0
    %1074 = vmatprep.subr.mxu0 0.0
    %1075 = vmatpush1.xpose.msra.mxu0 0.0
    %1076 = vmatprep.subr.mxu0 0.0
    %1077 = vmatpush1.xpose.msra.mxu0 0.0
    %1078 = vmatprep.subr.mxu0 0.0
    %1079 = vmatpush1.xpose.msra.mxu0 0.0
    %1080 = vmatprep.subr.mxu0 0.0
    %1081 = vmatpush1.xpose.msra.mxu0 0.0
    %1082 = vmatprep.subr.mxu0 0.0
    %1083 = vmatpush1.xpose.msra.mxu0 0.0
    %1084 = vmatprep.subr.mxu0 0.0
    %1085 = vmatpush1.xpose.msra.mxu0 0.0
    %1086 = vmatprep.subr.mxu0 0.0
    %1087 = vmatpush1.xpose.msra.mxu0 0.0
    %1088 = vmatprep.subr.mxu0 0.0
    %1089 = vmatpush1.xpose.msra.mxu0 0.0
    %1090 = vmatprep.subr.mxu0 0.0
    %1091 = vmatpush1.xpose.msra.mxu0 0.0
    %1092 = vmatprep.subr.mxu0 0.0
    %1093 = vmatpush1.xpose.msra.mxu0 0.0
    %1094 = vmatprep.subr.mxu0 0.0
    %1095 = vmatpush1.xpose.msra.mxu0 0.0
    %1096 = vmatprep.subr.mxu0 0.0
    %1097 = vmatpush1.xpose.msra.mxu0 0.0
    %1098 = vmatprep.subr.mxu0 0.0
    %1099 = vmatpush1.xpose.msra.mxu0 0.0
    %1100 = vmatprep.subr.mxu0 0.0
    %1101 = vmatpush1.xpose.msra.mxu0 0.0
    %1102 = vmatprep.subr.mxu0 0.0
    %1103 = vmatpush1.xpose.msra.mxu0 0.0
    %1104 = vmatprep.subr.mxu0 0.0
    %1105 = vmatpush1.xpose.msra.mxu0 0.0
    %1106 = vmatprep.subr.mxu0 0.0
    %1107 = vmatpush1.xpose.msra.mxu0 0.0
    %1108 = vmatprep.subr.mxu0 0.0
    %1109 = vmatpush1.xpose.msra.mxu0 0.0
    %1110 = vmatprep.subr.mxu0 0.0
    %1111 = vmatpush1.xpose.msra.mxu0 0.0
    %1112 = vmatprep.subr.mxu0 0.0
    %1113 = vmatpush1.xpose.msra.mxu0 0.0
    %1114 = vmatprep.subr.mxu0 0.0
    %1115 = vmatpush1.xpose.msra.mxu0 0.0
    %1116 = vmatprep.mubr.f32.mxu0 0.0
    %1117 = vmatmul.mubr.f32.gmra.mrb[0].mxu0 %v1048
    %v1118 = vpop.f32.mrb[0].mxu0
    %v1119 = vadd.f32 0.0, %v1118
    %v1120 = vpop.f32.mrb[0].mxu0
    %1121 = vdwg.mxu0
    %v1122 = vsel %vm142, %v1041, -inf
    %1123 = vmax.xlane.f32.xlu0 %v1122
    %v1124 = vpop.xlane.xlu0 %1123
    %v1125 = vsel %vm142, %v1119, -inf
    %1126 = vmax.xlane.f32.xlu0 %v1125
    %v1127 = vpop.xlane.xlu0 %1126
    %v1128 = vsub.f32 %v1041, %v1124
    %v1129 = vsub.f32 %v1119, %v1127
    %v1130 = vmul.f32 %v1128, 1.442695
    %v1131 = vpow.pop %v1130
    %v1132 = vmul.f32 %v1129, 1.442695
    %v1133 = vpow.pop %v1132
    %v1134 = vsel %vm142, %v1131, 0.0
    %1135 = vadd.xlane.f32.xlu0 %v1134
    %v1136 = vpop.xlane.xlu0 %1135
    %v1137 = vsel %vm142, %v1133, 0.0
    %1138 = vadd.xlane.f32.xlu0 %v1137
    %v1139 = vpop.xlane.xlu0 %1138
    %v1140 = vrcp.pop %v1136
    %v1141 = vrcp.pop %v1139
    %v1142 = vmul.f32 %v1131, %v1140
    %v1143 = vmul.f32 %v1133, %v1141
    %1144 = vrot.lane.b32.xlu0 %v125, 48
    %v1145 = vpop.permute.xlu0 %1144
    %v1148 = vsel %vm142, %v1142, 0
    %1150 = vmatprep.subr.mxu0 0.0
    %1151 = vmatpush1.msra.mxu0 %v1145
    %1152 = vmatprep.subr.mxu0 0.0
    %1153 = vmatpush1.msra.mxu0 0.0
    %1154 = vmatprep.subr.mxu0 0.0
    %1155 = vmatpush1.msra.mxu0 0.0
    %1156 = vmatprep.subr.mxu0 0.0
    %1157 = vmatpush1.msra.mxu0 0.0
    %1158 = vmatprep.subr.mxu0 0.0
    %1159 = vmatpush1.msra.mxu0 0.0
    %1160 = vmatprep.subr.mxu0 0.0
    %1161 = vmatpush1.msra.mxu0 0.0
    %1162 = vmatprep.subr.mxu0 0.0
    %1163 = vmatpush1.msra.mxu0 0.0
    %1164 = vmatprep.subr.mxu0 0.0
    %1165 = vmatpush1.msra.mxu0 0.0
    %1166 = vmatprep.subr.mxu0 0.0
    %1167 = vmatpush1.msra.mxu0 0.0
    %1168 = vmatprep.subr.mxu0 0.0
    %1169 = vmatpush1.msra.mxu0 0.0
    %1170 = vmatprep.subr.mxu0 0.0
    %1171 = vmatpush1.msra.mxu0 0.0
    %1172 = vmatprep.subr.mxu0 0.0
    %1173 = vmatpush1.msra.mxu0 0.0
    %1174 = vmatprep.subr.mxu0 0.0
    %1175 = vmatpush1.msra.mxu0 0.0
    %1176 = vmatprep.subr.mxu0 0.0
    %1177 = vmatpush1.msra.mxu0 0.0
    %1178 = vmatprep.subr.mxu0 0.0
    %1179 = vmatpush1.msra.mxu0 0.0
    %1180 = vmatprep.subr.mxu0 0.0
    %1181 = vmatpush1.msra.mxu0 0.0
    %1182 = vmatprep.subr.mxu0 0.0
    %1183 = vmatpush1.msra.mxu0 0.0
    %1184 = vmatprep.subr.mxu0 0.0
    %1185 = vmatpush1.msra.mxu0 0.0
    %1186 = vmatprep.subr.mxu0 0.0
    %1187 = vmatpush1.msra.mxu0 0.0
    %1188 = vmatprep.subr.mxu0 0.0
    %1189 = vmatpush1.msra.mxu0 0.0
    %1190 = vmatprep.subr.mxu0 0.0
    %1191 = vmatpush1.msra.mxu0 0.0
    %1192 = vmatprep.subr.mxu0 0.0
    %1193 = vmatpush1.msra.mxu0 0.0
    %1194 = vmatprep.subr.mxu0 0.0
    %1195 = vmatpush1.msra.mxu0 0.0
    %1196 = vmatprep.subr.mxu0 0.0
    %1197 = vmatpush1.msra.mxu0 0.0
    %1198 = vmatprep.subr.mxu0 0.0
    %1199 = vmatpush1.msra.mxu0 0.0
    %1200 = vmatprep.subr.mxu0 0.0
    %1201 = vmatpush1.msra.mxu0 0.0
    %1202 = vmatprep.subr.mxu0 0.0
    %1203 = vmatpush1.msra.mxu0 0.0
    %1204 = vmatprep.subr.mxu0 0.0
    %1205 = vmatpush1.msra.mxu0 0.0
    %1206 = vmatprep.subr.mxu0 0.0
    %1207 = vmatpush1.msra.mxu0 0.0
    %1208 = vmatprep.subr.mxu0 0.0
    %1209 = vmatpush1.msra.mxu0 0.0
    %1210 = vmatprep.subr.mxu0 0.0
    %1211 = vmatpush1.msra.mxu0 0.0
    %1212 = vmatprep.subr.mxu0 0.0
    %1213 = vmatpush1.msra.mxu0 0.0
    %1214 = vmatprep.mubr.f32.mxu0 0.0
    %1215 = vmatmul.mubr.f32.gmra.mrb[0].mxu0 %v1148
    %v1216 = vpop.f32.mrb[0].mxu0
    %v1217 = vadd.f32 0.0, %v1216
    %v1218 = vpop.f32.mrb[0].mxu0
    %1219 = vdwg.mxu0
    %1220 = vrot.lane.b32.xlu0 %v130, 48
    %v1221 = vpop.permute.xlu0 %1220
    %v1224 = vsel %vm142, %v1143, 0
    %1226 = vmatprep.subr.mxu0 0.0
    %1227 = vmatpush1.msra.mxu0 %v1221
    %1228 = vmatprep.subr.mxu0 0.0
    %1229 = vmatpush1.msra.mxu0 0.0
    %1230 = vmatprep.subr.mxu0 0.0
    %1231 = vmatpush1.msra.mxu0 0.0
    %1232 = vmatprep.subr.mxu0 0.0
    %1233 = vmatpush1.msra.mxu0 0.0
    %1234 = vmatprep.subr.mxu0 0.0
    %1235 = vmatpush1.msra.mxu0 0.0
    %1236 = vmatprep.subr.mxu0 0.0
    %1237 = vmatpush1.msra.mxu0 0.0
    %1238 = vmatprep.subr.mxu0 0.0
    %1239 = vmatpush1.msra.mxu0 0.0
    %1240 = vmatprep.subr.mxu0 0.0
    %1241 = vmatpush1.msra.mxu0 0.0
    %1242 = vmatprep.subr.mxu0 0.0
    %1243 = vmatpush1.msra.mxu0 0.0
    %1244 = vmatprep.subr.mxu0 0.0
    %1245 = vmatpush1.msra.mxu0 0.0
    %1246 = vmatprep.subr.mxu0 0.0
    %1247 = vmatpush1.msra.mxu0 0.0
    %1248 = vmatprep.subr.mxu0 0.0
    %1249 = vmatpush1.msra.mxu0 0.0
    %1250 = vmatprep.subr.mxu0 0.0
    %1251 = vmatpush1.msra.mxu0 0.0
    %1252 = vmatprep.subr.mxu0 0.0
    %1253 = vmatpush1.msra.mxu0 0.0
    %1254 = vmatprep.subr.mxu0 0.0
    %1255 = vmatpush1.msra.mxu0 0.0
    %1256 = vmatprep.subr.mxu0 0.0
    %1257 = vmatpush1.msra.mxu0 0.0
    %1258 = vmatprep.subr.mxu0 0.0
    %1259 = vmatpush1.msra.mxu0 0.0
    %1260 = vmatprep.subr.mxu0 0.0
    %1261 = vmatpush1.msra.mxu0 0.0
    %1262 = vmatprep.subr.mxu0 0.0
    %1263 = vmatpush1.msra.mxu0 0.0
    %1264 = vmatprep.subr.mxu0 0.0
    %1265 = vmatpush1.msra.mxu0 0.0
    %1266 = vmatprep.subr.mxu0 0.0
    %1267 = vmatpush1.msra.mxu0 0.0
    %1268 = vmatprep.subr.mxu0 0.0
    %1269 = vmatpush1.msra.mxu0 0.0
    %1270 = vmatprep.subr.mxu0 0.0
    %1271 = vmatpush1.msra.mxu0 0.0
    %1272 = vmatprep.subr.mxu0 0.0
    %1273 = vmatpush1.msra.mxu0 0.0
    %1274 = vmatprep.subr.mxu0 0.0
    %1275 = vmatpush1.msra.mxu0 0.0
    %1276 = vmatprep.subr.mxu0 0.0
    %1277 = vmatpush1.msra.mxu0 0.0
    %1278 = vmatprep.subr.mxu0 0.0
    %1279 = vmatpush1.msra.mxu0 0.0
    %1280 = vmatprep.subr.mxu0 0.0
    %1281 = vmatpush1.msra.mxu0 0.0
    %1282 = vmatprep.subr.mxu0 0.0
    %1283 = vmatpush1.msra.mxu0 0.0
    %1284 = vmatprep.subr.mxu0 0.0
    %1285 = vmatpush1.msra.mxu0 0.0
    %1286 = vmatprep.subr.mxu0 0.0
    %1287 = vmatpush1.msra.mxu0 0.0
    %1288 = vmatprep.subr.mxu0 0.0
    %1289 = vmatpush1.msra.mxu0 0.0
    %1290 = vmatprep.mubr.f32.mxu0 0.0
    %1291 = vmatmul.mubr.f32.gmra.mrb[0].mxu0 %v1224
    %v1292 = vpop.f32.mrb[0].mxu0
    %v1293 = vadd.f32 0.0, %v1292
    %v1294 = vpop.f32.mrb[0].mxu0
    %1295 = vdwg.mxu0
    %v1296 = vld [vmem:[#allocation5 + $0x30] sm:$0xff]
    %v1298 = vsel %vm142, %v1217, 0
    %v1301 = vsel %vm142, %v1293, 0
    %1303 = vmatprep.subr.mxu0 0.0
    %1304 = vmatpush1.msra.mxu0 %v1296
    %1305 = vmatprep.subr.mxu0 0.0
    %1306 = vmatpush1.msra.mxu0 0.0
    %1307 = vmatprep.subr.mxu0 0.0
    %1308 = vmatpush1.msra.mxu0 0.0
    %1309 = vmatprep.subr.mxu0 0.0
    %1310 = vmatpush1.msra.mxu0 0.0
    %1311 = vmatprep.subr.mxu0 0.0
    %1312 = vmatpush1.msra.mxu0 0.0
    %1313 = vmatprep.subr.mxu0 0.0
    %1314 = vmatpush1.msra.mxu0 0.0
    %1315 = vmatprep.subr.mxu0 0.0
    %1316 = vmatpush1.msra.mxu0 0.0
    %1317 = vmatprep.subr.mxu0 0.0
    %1318 = vmatpush1.msra.mxu0 0.0
    %1319 = vmatprep.subr.mxu0 0.0
    %1320 = vmatpush1.msra.mxu0 0.0
    %1321 = vmatprep.subr.mxu0 0.0
    %1322 = vmatpush1.msra.mxu0 0.0
    %1323 = vmatprep.subr.mxu0 0.0
    %1324 = vmatpush1.msra.mxu0 0.0
    %1325 = vmatprep.subr.mxu0 0.0
    %1326 = vmatpush1.msra.mxu0 0.0
    %1327 = vmatprep.subr.mxu0 0.0
    %1328 = vmatpush1.msra.mxu0 0.0
    %1329 = vmatprep.subr.mxu0 0.0
    %1330 = vmatpush1.msra.mxu0 0.0
    %1331 = vmatprep.subr.mxu0 0.0
    %1332 = vmatpush1.msra.mxu0 0.0
    %1333 = vmatprep.subr.mxu0 0.0
    %1334 = vmatpush1.msra.mxu0 0.0
    %1335 = vmatprep.subr.mxu0 0.0
    %1336 = vmatpush1.msra.mxu0 0.0
    %1337 = vmatprep.subr.mxu0 0.0
    %1338 = vmatpush1.msra.mxu0 0.0
    %1339 = vmatprep.subr.mxu0 0.0
    %1340 = vmatpush1.msra.mxu0 0.0
    %1341 = vmatprep.subr.mxu0 0.0
    %1342 = vmatpush1.msra.mxu0 0.0
    %1343 = vmatprep.subr.mxu0 0.0
    %1344 = vmatpush1.msra.mxu0 0.0
    %1345 = vmatprep.subr.mxu0 0.0
    %1346 = vmatpush1.msra.mxu0 0.0
    %1347 = vmatprep.subr.mxu0 0.0
    %1348 = vmatpush1.msra.mxu0 0.0
    %1349 = vmatprep.subr.mxu0 0.0
    %1350 = vmatpush1.msra.mxu0 0.0
    %1351 = vmatprep.subr.mxu0 0.0
    %1352 = vmatpush1.msra.mxu0 0.0
    %1353 = vmatprep.subr.mxu0 0.0
    %1354 = vmatpush1.msra.mxu0 0.0
    %1355 = vmatprep.subr.mxu0 0.0
    %1356 = vmatpush1.msra.mxu0 0.0
    %1357 = vmatprep.subr.mxu0 0.0
    %1358 = vmatpush1.msra.mxu0 0.0
    %1359 = vmatprep.subr.mxu0 0.0
    %1360 = vmatpush1.msra.mxu0 0.0
    %1361 = vmatprep.subr.mxu0 0.0
    %1362 = vmatpush1.msra.mxu0 0.0
    %1363 = vmatprep.subr.mxu0 0.0
    %1364 = vmatpush1.msra.mxu0 0.0
    %1365 = vmatprep.subr.mxu0 0.0
    %1366 = vmatpush1.msra.mxu0 0.0
    %1367 = vmatprep.mubr.f32.mxu0 0.0
    %1368 = vmatmul.mubr.f32.gmra.mrb[0].mxu0 %v1298
    %v1369 = vpop.f32.mrb[0].mxu0
    %v1370 = vadd.f32 0.0, %v1369
    %v1371 = vpop.f32.mrb[0].mxu0
    %1372 = vmatprep.mubr.f32.mxu0 0.0
    %1373 = vmatmul.mubr.f32.gmra.mrb[0].mxu0 %v1301
    %v1374 = vpop.f32.mrb[0].mxu0
    %v1375 = vadd.f32 0.0, %v1374
    %v1376 = vpop.f32.mrb[0].mxu0
    %1377 = vdwg.mxu0
    %v1378 = vadd.f32 %v964, %v1370
    %v1379 = vadd.f32 %v965, %v1375
    %1380 = vrot.lane.b32.xlu0 %v125, 104
    %v1381 = vpop.permute.xlu0 %1380
    %1382 = vrot.lane.b32.xlu0 %v125, 72
    %v1383 = vpop.permute.xlu0 %1382
    %v1384 = vsel %vm142, %v1381, 0
    %v1386 = vsel %vm142, %v1383, 0
    %1388 = vmatprep.subr.mxu0 0.0
    %1389 = vmatpush1.xpose.msra.mxu0 %v1386
    %1390 = vmatprep.subr.mxu0 0.0
    %1391 = vmatpush1.xpose.msra.mxu0 0.0
    %1392 = vmatprep.subr.mxu0 0.0
    %1393 = vmatpush1.xpose.msra.mxu0 0.0
    %1394 = vmatprep.subr.mxu0 0.0
    %1395 = vmatpush1.xpose.msra.mxu0 0.0
    %1396 = vmatprep.subr.mxu0 0.0
    %1397 = vmatpush1.xpose.msra.mxu0 0.0
    %1398 = vmatprep.subr.mxu0 0.0
    %1399 = vmatpush1.xpose.msra.mxu0 0.0
    %1400 = vmatprep.subr.mxu0 0.0
    %1401 = vmatpush1.xpose.msra.mxu0 0.0
    %1402 = vmatprep.subr.mxu0 0.0
    %1403 = vmatpush1.xpose.msra.mxu0 0.0
    %1404 = vmatprep.subr.mxu0 0.0
    %1405 = vmatpush1.xpose.msra.mxu0 0.0
    %1406 = vmatprep.subr.mxu0 0.0
    %1407 = vmatpush1.xpose.msra.mxu0 0.0
    %1408 = vmatprep.subr.mxu0 0.0
    %1409 = vmatpush1.xpose.msra.mxu0 0.0
    %1410 = vmatprep.subr.mxu0 0.0
    %1411 = vmatpush1.xpose.msra.mxu0 0.0
    %1412 = vmatprep.subr.mxu0 0.0
    %1413 = vmatpush1.xpose.msra.mxu0 0.0
    %1414 = vmatprep.subr.mxu0 0.0
    %1415 = vmatpush1.xpose.msra.mxu0 0.0
    %1416 = vmatprep.subr.mxu0 0.0
    %1417 = vmatpush1.xpose.msra.mxu0 0.0
    %1418 = vmatprep.subr.mxu0 0.0
    %1419 = vmatpush1.xpose.msra.mxu0 0.0
    %1420 = vmatprep.subr.mxu0 0.0
    %1421 = vmatpush1.xpose.msra.mxu0 0.0
    %1422 = vmatprep.subr.mxu0 0.0
    %1423 = vmatpush1.xpose.msra.mxu0 0.0
    %1424 = vmatprep.subr.mxu0 0.0
    %1425 = vmatpush1.xpose.msra.mxu0 0.0
    %1426 = vmatprep.subr.mxu0 0.0
    %1427 = vmatpush1.xpose.msra.mxu0 0.0
    %1428 = vmatprep.subr.mxu0 0.0
    %1429 = vmatpush1.xpose.msra.mxu0 0.0
    %1430 = vmatprep.subr.mxu0 0.0
    %1431 = vmatpush1.xpose.msra.mxu0 0.0
    %1432 = vmatprep.subr.mxu0 0.0
    %1433 = vmatpush1.xpose.msra.mxu0 0.0
    %1434 = vmatprep.subr.mxu0 0.0
    %1435 = vmatpush1.xpose.msra.mxu0 0.0
    %1436 = vmatprep.subr.mxu0 0.0
    %1437 = vmatpush1.xpose.msra.mxu0 0.0
    %1438 = vmatprep.subr.mxu0 0.0
    %1439 = vmatpush1.xpose.msra.mxu0 0.0
    %1440 = vmatprep.subr.mxu0 0.0
    %1441 = vmatpush1.xpose.msra.mxu0 0.0
    %1442 = vmatprep.subr.mxu0 0.0
    %1443 = vmatpush1.xpose.msra.mxu0 0.0
    %1444 = vmatprep.subr.mxu0 0.0
    %1445 = vmatpush1.xpose.msra.mxu0 0.0
    %1446 = vmatprep.subr.mxu0 0.0
    %1447 = vmatpush1.xpose.msra.mxu0 0.0
    %1448 = vmatprep.subr.mxu0 0.0
    %1449 = vmatpush1.xpose.msra.mxu0 0.0
    %1450 = vmatprep.subr.mxu0 0.0
    %1451 = vmatpush1.xpose.msra.mxu0 0.0
    %1452 = vmatprep.mubr.f32.mxu0 0.0
    %1453 = vmatmul.mubr.f32.gmra.mrb[0].mxu0 %v1384
    %v1454 = vpop.f32.mrb[0].mxu0
    %v1455 = vadd.f32 0.0, %v1454
    %v1456 = vpop.f32.mrb[0].mxu0
    %1457 = vdwg.mxu0
    %1458 = vrot.lane.b32.xlu0 %v130, 104
    %v1459 = vpop.permute.xlu0 %1458
    %1460 = vrot.lane.b32.xlu0 %v130, 72
    %v1461 = vpop.permute.xlu0 %1460
    %v1462 = vsel %vm142, %v1459, 0
    %v1464 = vsel %vm142, %v1461, 0
    %1466 = vmatprep.subr.mxu0 0.0
    %1467 = vmatpush1.xpose.msra.mxu0 %v1464
    %1468 = vmatprep.subr.mxu0 0.0
    %1469 = vmatpush1.xpose.msra.mxu0 0.0
    %1470 = vmatprep.subr.mxu0 0.0
    %1471 = vmatpush1.xpose.msra.mxu0 0.0
    %1472 = vmatprep.subr.mxu0 0.0
    %1473 = vmatpush1.xpose.msra.mxu0 0.0
    %1474 = vmatprep.subr.mxu0 0.0
    %1475 = vmatpush1.xpose.msra.mxu0 0.0
    %1476 = vmatprep.subr.mxu0 0.0
    %1477 = vmatpush1.xpose.msra.mxu0 0.0
    %1478 = vmatprep.subr.mxu0 0.0
    %1479 = vmatpush1.xpose.msra.mxu0 0.0
    %1480 = vmatprep.subr.mxu0 0.0
    %1481 = vmatpush1.xpose.msra.mxu0 0.0
    %1482 = vmatprep.subr.mxu0 0.0
    %1483 = vmatpush1.xpose.msra.mxu0 0.0
    %1484 = vmatprep.subr.mxu0 0.0
    %1485 = vmatpush1.xpose.msra.mxu0 0.0
    %1486 = vmatprep.subr.mxu0 0.0
    %1487 = vmatpush1.xpose.msra.mxu0 0.0
    %1488 = vmatprep.subr.mxu0 0.0
    %1489 = vmatpush1.xpose.msra.mxu0 0.0
    %1490 = vmatprep.subr.mxu0 0.0
    %1491 = vmatpush1.xpose.msra.mxu0 0.0
    %1492 = vmatprep.subr.mxu0 0.0
    %1493 = vmatpush1.xpose.msra.mxu0 0.0
    %1494 = vmatprep.subr.mxu0 0.0
    %1495 = vmatpush1.xpose.msra.mxu0 0.0
    %1496 = vmatprep.subr.mxu0 0.0
    %1497 = vmatpush1.xpose.msra.mxu0 0.0
    %1498 = vmatprep.subr.mxu0 0.0
    %1499 = vmatpush1.xpose.msra.mxu0 0.0
    %1500 = vmatprep.subr.mxu0 0.0
    %1501 = vmatpush1.xpose.msra.mxu0 0.0
    %1502 = vmatprep.subr.mxu0 0.0
    %1503 = vmatpush1.xpose.msra.mxu0 0.0
    %1504 = vmatprep.subr.mxu0 0.0
    %1505 = vmatpush1.xpose.msra.mxu0 0.0
    %1506 = vmatprep.subr.mxu0 0.0
    %1507 = vmatpush1.xpose.msra.mxu0 0.0
    %1508 = vmatprep.subr.mxu0 0.0
    %1509 = vmatpush1.xpose.msra.mxu0 0.0
    %1510 = vmatprep.subr.mxu0 0.0
    %1511 = vmatpush1.xpose.msra.mxu0 0.0
    %1512 = vmatprep.subr.mxu0 0.0
    %1513 = vmatpush1.xpose.msra.mxu0 0.0
    %1514 = vmatprep.subr.mxu0 0.0
    %1515 = vmatpush1.xpose.msra.mxu0 0.0
    %1516 = vmatprep.subr.mxu0 0.0
    %1517 = vmatpush1.xpose.msra.mxu0 0.0
    %1518 = vmatprep.subr.mxu0 0.0
    %1519 = vmatpush1.xpose.msra.mxu0 0.0
    %1520 = vmatprep.subr.mxu0 0.0
    %1521 = vmatpush1.xpose.msra.mxu0 0.0
    %1522 = vmatprep.subr.mxu0 0.0
    %1523 = vmatpush1.xpose.msra.mxu0 0.0
    %1524 = vmatprep.subr.mxu0 0.0
    %1525 = vmatpush1.xpose.msra.mxu0 0.0
    %1526 = vmatprep.subr.mxu0 0.0
    %1527 = vmatpush1.xpose.msra.mxu0 0.0
    %1528 = vmatprep.subr.mxu0 0.0
    %1529 = vmatpush1.xpose.msra.mxu0 0.0
    %1530 = vmatprep.mubr.f32.mxu0 0.0
    %1531 = vmatmul.mubr.f32.gmra.mrb[0].mxu0 %v1462
    %v1532 = vpop.f32.mrb[0].mxu0
    %v1533 = vadd.f32 0.0, %v1532
    %v1534 = vpop.f32.mrb[0].mxu0
    %1535 = vdwg.mxu0
    %v1536 = vsel %vm142, %v1455, -inf
    %1537 = vmax.xlane.f32.xlu0 %v1536
    %v1538 = vpop.xlane.xlu0 %1537
    %v1539 = vsel %vm142, %v1533, -inf
    %1540 = vmax.xlane.f32.xlu0 %v1539
    %v1541 = vpop.xlane.xlu0 %1540
    %v1542 = vsub.f32 %v1455, %v1538
    %v1543 = vsub.f32 %v1533, %v1541
    %v1544 = vmul.f32 %v1542, 1.442695
    %v1545 = vpow.pop %v1544
    %v1546 = vmul.f32 %v1543, 1.442695
    %v1547 = vpow.pop %v1546
    %v1548 = vsel %vm142, %v1545, 0.0
    %1549 = vadd.xlane.f32.xlu0 %v1548
    %v1550 = vpop.xlane.xlu0 %1549
    %v1551 = vsel %vm142, %v1547, 0.0
    %1552 = vadd.xlane.f32.xlu0 %v1551
    %v1553 = vpop.xlane.xlu0 %1552
    %v1554 = vrcp.pop %v1550
    %v1555 = vrcp.pop %v1553
    %v1556 = vmul.f32 %v1545, %v1554
    %v1557 = vmul.f32 %v1547, %v1555
    %1558 = vrot.lane.b32.xlu0 %v125, 40
    %v1559 = vpop.permute.xlu0 %1558
    %v1562 = vsel %vm142, %v1556, 0
    %1564 = vmatprep.subr.mxu0 0.0
    %1565 = vmatpush1.msra.mxu0 %v1559
    %1566 = vmatprep.subr.mxu0 0.0
    %1567 = vmatpush1.msra.mxu0 0.0
    %1568 = vmatprep.subr.mxu0 0.0
    %1569 = vmatpush1.msra.mxu0 0.0
    %1570 = vmatprep.subr.mxu0 0.0
    %1571 = vmatpush1.msra.mxu0 0.0
    %1572 = vmatprep.subr.mxu0 0.0
    %1573 = vmatpush1.msra.mxu0 0.0
    %1574 = vmatprep.subr.mxu0 0.0
    %1575 = vmatpush1.msra.mxu0 0.0
    %1576 = vmatprep.subr.mxu0 0.0
    %1577 = vmatpush1.msra.mxu0 0.0
    %1578 = vmatprep.subr.mxu0 0.0
    %1579 = vmatpush1.msra.mxu0 0.0
    %1580 = vmatprep.subr.mxu0 0.0
    %1581 = vmatpush1.msra.mxu0 0.0
    %1582 = vmatprep.subr.mxu0 0.0
    %1583 = vmatpush1.msra.mxu0 0.0
    %1584 = vmatprep.subr.mxu0 0.0
    %1585 = vmatpush1.msra.mxu0 0.0
    %1586 = vmatprep.subr.mxu0 0.0
    %1587 = vmatpush1.msra.mxu0 0.0
    %1588 = vmatprep.subr.mxu0 0.0
    %1589 = vmatpush1.msra.mxu0 0.0
    %1590 = vmatprep.subr.mxu0 0.0
    %1591 = vmatpush1.msra.mxu0 0.0
    %1592 = vmatprep.subr.mxu0 0.0
    %1593 = vmatpush1.msra.mxu0 0.0
    %1594 = vmatprep.subr.mxu0 0.0
    %1595 = vmatpush1.msra.mxu0 0.0
    %1596 = vmatprep.subr.mxu0 0.0
    %1597 = vmatpush1.msra.mxu0 0.0
    %1598 = vmatprep.subr.mxu0 0.0
    %1599 = vmatpush1.msra.mxu0 0.0
    %1600 = vmatprep.subr.mxu0 0.0
    %1601 = vmatpush1.msra.mxu0 0.0
    %1602 = vmatprep.subr.mxu0 0.0
    %1603 = vmatpush1.msra.mxu0 0.0
    %1604 = vmatprep.subr.mxu0 0.0
    %1605 = vmatpush1.msra.mxu0 0.0
    %1606 = vmatprep.subr.mxu0 0.0
    %1607 = vmatpush1.msra.mxu0 0.0
    %1608 = vmatprep.subr.mxu0 0.0
    %1609 = vmatpush1.msra.mxu0 0.0
    %1610 = vmatprep.subr.mxu0 0.0
    %1611 = vmatpush1.msra.mxu0 0.0
    %1612 = vmatprep.subr.mxu0 0.0
    %1613 = vmatpush1.msra.mxu0 0.0
    %1614 = vmatprep.subr.mxu0 0.0
    %1615 = vmatpush1.msra.mxu0 0.0
    %1616 = vmatprep.subr.mxu0 0.0
    %1617 = vmatpush1.msra.mxu0 0.0
    %1618 = vmatprep.subr.mxu0 0.0
    %1619 = vmatpush1.msra.mxu0 0.0
    %1620 = vmatprep.subr.mxu0 0.0
    %1621 = vmatpush1.msra.mxu0 0.0
    %1622 = vmatprep.subr.mxu0 0.0
    %1623 = vmatpush1.msra.mxu0 0.0
    %1624 = vmatprep.subr.mxu0 0.0
    %1625 = vmatpush1.msra.mxu0 0.0
    %1626 = vmatprep.subr.mxu0 0.0
    %1627 = vmatpush1.msra.mxu0 0.0
    %1628 = vmatprep.mubr.f32.mxu0 0.0
    %1629 = vmatmul.mubr.f32.gmra.mrb[0].mxu0 %v1562
    %v1630 = vpop.f32.mrb[0].mxu0
    %v1631 = vadd.f32 0.0, %v1630
    %v1632 = vpop.f32.mrb[0].mxu0
    %1633 = vdwg.mxu0
    %1634 = vrot.lane.b32.xlu0 %v130, 40
    %v1635 = vpop.permute.xlu0 %1634
    %v1638 = vsel %vm142, %v1557, 0
    %1640 = vmatprep.subr.mxu0 0.0
    %1641 = vmatpush1.msra.mxu0 %v1635
    %1642 = vmatprep.subr.mxu0 0.0
    %1643 = vmatpush1.msra.mxu0 0.0
    %1644 = vmatprep.subr.mxu0 0.0
    %1645 = vmatpush1.msra.mxu0 0.0
    %1646 = vmatprep.subr.mxu0 0.0
    %1647 = vmatpush1.msra.mxu0 0.0
    %1648 = vmatprep.subr.mxu0 0.0
    %1649 = vmatpush1.msra.mxu0 0.0
    %1650 = vmatprep.subr.mxu0 0.0
    %1651 = vmatpush1.msra.mxu0 0.0
    %1652 = vmatprep.subr.mxu0 0.0
    %1653 = vmatpush1.msra.mxu0 0.0
    %1654 = vmatprep.subr.mxu0 0.0
    %1655 = vmatpush1.msra.mxu0 0.0
    %1656 = vmatprep.subr.mxu0 0.0
    %1657 = vmatpush1.msra.mxu0 0.0
    %1658 = vmatprep.subr.mxu0 0.0
    %1659 = vmatpush1.msra.mxu0 0.0
    %1660 = vmatprep.subr.mxu0 0.0
    %1661 = vmatpush1.msra.mxu0 0.0
    %1662 = vmatprep.subr.mxu0 0.0
    %1663 = vmatpush1.msra.mxu0 0.0
    %1664 = vmatprep.subr.mxu0 0.0
    %1665 = vmatpush1.msra.mxu0 0.0
    %1666 = vmatprep.subr.mxu0 0.0
    %1667 = vmatpush1.msra.mxu0 0.0
    %1668 = vmatprep.subr.mxu0 0.0
    %1669 = vmatpush1.msra.mxu0 0.0
    %1670 = vmatprep.subr.mxu0 0.0
    %1671 = vmatpush1.msra.mxu0 0.0
    %1672 = vmatprep.subr.mxu0 0.0
    %1673 = vmatpush1.msra.mxu0 0.0
    %1674 = vmatprep.subr.mxu0 0.0
    %1675 = vmatpush1.msra.mxu0 0.0
    %1676 = vmatprep.subr.mxu0 0.0
    %1677 = vmatpush1.msra.mxu0 0.0
    %1678 = vmatprep.subr.mxu0 0.0
    %1679 = vmatpush1.msra.mxu0 0.0
    %1680 = vmatprep.subr.mxu0 0.0
    %1681 = vmatpush1.msra.mxu0 0.0
    %1682 = vmatprep.subr.mxu0 0.0
    %1683 = vmatpush1.msra.mxu0 0.0
    %1684 = vmatprep.subr.mxu0 0.0
    %1685 = vmatpush1.msra.mxu0 0.0
    %1686 = vmatprep.subr.mxu0 0.0
    %1687 = vmatpush1.msra.mxu0 0.0
    %1688 = vmatprep.subr.mxu0 0.0
    %1689 = vmatpush1.msra.mxu0 0.0
    %1690 = vmatprep.subr.mxu0 0.0
    %1691 = vmatpush1.msra.mxu0 0.0
    %1692 = vmatprep.subr.mxu0 0.0
    %1693 = vmatpush1.msra.mxu0 0.0
    %1694 = vmatprep.subr.mxu0 0.0
    %1695 = vmatpush1.msra.mxu0 0.0
    %1696 = vmatprep.subr.mxu0 0.0
    %1697 = vmatpush1.msra.mxu0 0.0
    %1698 = vmatprep.subr.mxu0 0.0
    %1699 = vmatpush1.msra.mxu0 0.0
    %1700 = vmatprep.subr.mxu0 0.0
    %1701 = vmatpush1.msra.mxu0 0.0
    %1702 = vmatprep.subr.mxu0 0.0
    %1703 = vmatpush1.msra.mxu0 0.0
    %1704 = vmatprep.mubr.f32.mxu0 0.0
    %1705 = vmatmul.mubr.f32.gmra.mrb[0].mxu0 %v1638
    %v1706 = vpop.f32.mrb[0].mxu0
    %v1707 = vadd.f32 0.0, %v1706
    %v1708 = vpop.f32.mrb[0].mxu0
    %1709 = vdwg.mxu0
    %v1710 = vld [vmem:[#allocation5 + $0x38] sm:$0xff]
    %v1712 = vsel %vm142, %v1631, 0
    %v1715 = vsel %vm142, %v1707, 0
    %1717 = vmatprep.subr.mxu0 0.0
    %1718 = vmatpush1.msra.mxu0 %v1710
    %1719 = vmatprep.subr.mxu0 0.0
    %1720 = vmatpush1.msra.mxu0 0.0
    %1721 = vmatprep.subr.mxu0 0.0
    %1722 = vmatpush1.msra.mxu0 0.0
    %1723 = vmatprep.subr.mxu0 0.0
    %1724 = vmatpush1.msra.mxu0 0.0
    %1725 = vmatprep.subr.mxu0 0.0
    %1726 = vmatpush1.msra.mxu0 0.0
    %1727 = vmatprep.subr.mxu0 0.0
    %1728 = vmatpush1.msra.mxu0 0.0
    %1729 = vmatprep.subr.mxu0 0.0
    %1730 = vmatpush1.msra.mxu0 0.0
    %1731 = vmatprep.subr.mxu0 0.0
    %1732 = vmatpush1.msra.mxu0 0.0
    %1733 = vmatprep.subr.mxu0 0.0
    %1734 = vmatpush1.msra.mxu0 0.0
    %1735 = vmatprep.subr.mxu0 0.0
    %1736 = vmatpush1.msra.mxu0 0.0
    %1737 = vmatprep.subr.mxu0 0.0
    %1738 = vmatpush1.msra.mxu0 0.0
    %1739 = vmatprep.subr.mxu0 0.0
    %1740 = vmatpush1.msra.mxu0 0.0
    %1741 = vmatprep.subr.mxu0 0.0
    %1742 = vmatpush1.msra.mxu0 0.0
    %1743 = vmatprep.subr.mxu0 0.0
    %1744 = vmatpush1.msra.mxu0 0.0
    %1745 = vmatprep.subr.mxu0 0.0
    %1746 = vmatpush1.msra.mxu0 0.0
    %1747 = vmatprep.subr.mxu0 0.0
    %1748 = vmatpush1.msra.mxu0 0.0
    %1749 = vmatprep.subr.mxu0 0.0
    %1750 = vmatpush1.msra.mxu0 0.0
    %1751 = vmatprep.subr.mxu0 0.0
    %1752 = vmatpush1.msra.mxu0 0.0
    %1753 = vmatprep.subr.mxu0 0.0
    %1754 = vmatpush1.msra.mxu0 0.0
    %1755 = vmatprep.subr.mxu0 0.0
    %1756 = vmatpush1.msra.mxu0 0.0
    %1757 = vmatprep.subr.mxu0 0.0
    %1758 = vmatpush1.msra.mxu0 0.0
    %1759 = vmatprep.subr.mxu0 0.0
    %1760 = vmatpush1.msra.mxu0 0.0
    %1761 = vmatprep.subr.mxu0 0.0
    %1762 = vmatpush1.msra.mxu0 0.0
    %1763 = vmatprep.subr.mxu0 0.0
    %1764 = vmatpush1.msra.mxu0 0.0
    %1765 = vmatprep.subr.mxu0 0.0
    %1766 = vmatpush1.msra.mxu0 0.0
    %1767 = vmatprep.subr.mxu0 0.0
    %1768 = vmatpush1.msra.mxu0 0.0
    %1769 = vmatprep.subr.mxu0 0.0
    %1770 = vmatpush1.msra.mxu0 0.0
    %1771 = vmatprep.subr.mxu0 0.0
    %1772 = vmatpush1.msra.mxu0 0.0
    %1773 = vmatprep.subr.mxu0 0.0
    %1774 = vmatpush1.msra.mxu0 0.0
    %1775 = vmatprep.subr.mxu0 0.0
    %1776 = vmatpush1.msra.mxu0 0.0
    %1777 = vmatprep.subr.mxu0 0.0
    %1778 = vmatpush1.msra.mxu0 0.0
    %1779 = vmatprep.subr.mxu0 0.0
    %1780 = vmatpush1.msra.mxu0 0.0
    %1781 = vmatprep.mubr.f32.mxu0 0.0
    %1782 = vmatmul.mubr.f32.gmra.mrb[0].mxu0 %v1712
    %v1783 = vpop.f32.mrb[0].mxu0
    %v1784 = vadd.f32 0.0, %v1783
    %v1785 = vpop.f32.mrb[0].mxu0
    %1786 = vmatprep.mubr.f32.mxu0 0.0
    %1787 = vmatmul.mubr.f32.gmra.mrb[0].mxu0 %v1715
    %v1788 = vpop.f32.mrb[0].mxu0
    %v1789 = vadd.f32 0.0, %v1788
    %v1790 = vpop.f32.mrb[0].mxu0
    %1791 = vdwg.mxu0
    %v1792 = vadd.f32 %v1378, %v1784
    %v1793 = vadd.f32 %v1379, %v1789
    %vm1794 = vcmask 130048
    %v1796 = vsel %vm1794, 0.0625, 0
    %1798 = vmatprep.subr.mxu0 0.0
    %1799 = vmatpush1.msra.mxu0 %v1792
    %1800 = vmatprep.subr.mxu0 0.0
    %1801 = vmatpush1.msra.mxu0 %v1793
    %1802 = vmatprep.subr.mxu0 0.0
    %1803 = vmatpush1.msra.mxu0 0.0
    %1804 = vmatprep.subr.mxu0 0.0
    %1805 = vmatpush1.msra.mxu0 0.0
    %1806 = vmatprep.subr.mxu0 0.0
    %1807 = vmatpush1.msra.mxu0 0.0
    %1808 = vmatprep.subr.mxu0 0.0
    %1809 = vmatpush1.msra.mxu0 0.0
    %1810 = vmatprep.subr.mxu0 0.0
    %1811 = vmatpush1.msra.mxu0 0.0
    %1812 = vmatprep.subr.mxu0 0.0
    %1813 = vmatpush1.msra.mxu0 0.0
    %1814 = vmatprep.subr.mxu0 0.0
    %1815 = vmatpush1.msra.mxu0 0.0
    %1816 = vmatprep.subr.mxu0 0.0
    %1817 = vmatpush1.msra.mxu0 0.0
    %1818 = vmatprep.subr.mxu0 0.0
    %1819 = vmatpush1.msra.mxu0 0.0
    %1820 = vmatprep.subr.mxu0 0.0
    %1821 = vmatpush1.msra.mxu0 0.0
    %1822 = vmatprep.subr.mxu0 0.0
    %1823 = vmatpush1.msra.mxu0 0.0
    %1824 = vmatprep.subr.mxu0 0.0
    %1825 = vmatpush1.msra.mxu0 0.0
    %1826 = vmatprep.subr.mxu0 0.0
    %1827 = vmatpush1.msra.mxu0 0.0
    %1828 = vmatprep.subr.mxu0 0.0
    %1829 = vmatpush1.msra.mxu0 0.0
    %1830 = vmatprep.subr.mxu0 0.0
    %1831 = vmatpush1.msra.mxu0 0.0
    %1832 = vmatprep.subr.mxu0 0.0
    %1833 = vmatpush1.msra.mxu0 0.0
    %1834 = vmatprep.subr.mxu0 0.0
    %1835 = vmatpush1.msra.mxu0 0.0
    %1836 = vmatprep.subr.mxu0 0.0
    %1837 = vmatpush1.msra.mxu0 0.0
    %1838 = vmatprep.subr.mxu0 0.0
    %1839 = vmatpush1.msra.mxu0 0.0
    %1840 = vmatprep.subr.mxu0 0.0
    %1841 = vmatpush1.msra.mxu0 0.0
    %1842 = vmatprep.subr.mxu0 0.0
    %1843 = vmatpush1.msra.mxu0 0.0
    %1844 = vmatprep.subr.mxu0 0.0
    %1845 = vmatpush1.msra.mxu0 0.0
    %1846 = vmatprep.subr.mxu0 0.0
    %1847 = vmatpush1.msra.mxu0 0.0
    %1848 = vmatprep.subr.mxu0 0.0
    %1849 = vmatpush1.msra.mxu0 0.0
    %1850 = vmatprep.subr.mxu0 0.0
    %1851 = vmatpush1.msra.mxu0 0.0
    %1852 = vmatprep.subr.mxu0 0.0
    %1853 = vmatpush1.msra.mxu0 0.0
    %1854 = vmatprep.subr.mxu0 0.0
    %1855 = vmatpush1.msra.mxu0 0.0
    %1856 = vmatprep.subr.mxu0 0.0
    %1857 = vmatpush1.msra.mxu0 0.0
    %1858 = vmatprep.subr.mxu0 0.0
    %1859 = vmatpush1.msra.mxu0 0.0
    %1860 = vmatprep.subr.mxu0 0.0
    %1861 = vmatpush1.msra.mxu0 0.0
    %1862 = vmatprep.mubr.f32.mxu0 0.0
    %1863 = vmatmul.mubr.f32.gmra.mrb[0].mxu0 %v1796
    %v1864 = vpop.f32.mrb[0].mxu0
    %v1865 = vadd.f32 0.0, %v1864
    %v1866 = vpop.f32.mrb[0].mxu0
    %1867 = vdwg.mxu0
    %v1868 = vlaneseq
    %v1869 = vshrl.u32 %v1868, 7
    %v1870 = vsub.s32 0, %v1869
    %v1871 = vrot.slane %v1865, %v1870
    %v1872 = vsub.f32 %v1792, %v1871
    %v1873 = vsub.f32 %v1793, %v1871
    %v1874 = vmul.f32 %v1872, %v1872
    %v1875 = vmul.f32 %v1873, %v1873
    %1876 = vmatprep.subr.mxu0 0.0
    %1877 = vmatpush1.msra.mxu0 %v1874
    %1878 = vmatprep.subr.mxu0 0.0
    %1879 = vmatpush1.msra.mxu0 %v1875
    %1880 = vmatprep.subr.mxu0 0.0
    %1881 = vmatpush1.msra.mxu0 0.0
    %1882 = vmatprep.subr.mxu0 0.0
    %1883 = vmatpush1.msra.mxu0 0.0
    %1884 = vmatprep.subr.mxu0 0.0
    %1885 = vmatpush1.msra.mxu0 0.0
    %1886 = vmatprep.subr.mxu0 0.0
    %1887 = vmatpush1.msra.mxu0 0.0
    %1888 = vmatprep.subr.mxu0 0.0
    %1889 = vmatpush1.msra.mxu0 0.0
    %1890 = vmatprep.subr.mxu0 0.0
    %1891 = vmatpush1.msra.mxu0 0.0
    %1892 = vmatprep.subr.mxu0 0.0
    %1893 = vmatpush1.msra.mxu0 0.0
    %1894 = vmatprep.subr.mxu0 0.0
    %1895 = vmatpush1.msra.mxu0 0.0
    %1896 = vmatprep.subr.mxu0 0.0
    %1897 = vmatpush1.msra.mxu0 0.0
    %1898 = vmatprep.subr.mxu0 0.0
    %1899 = vmatpush1.msra.mxu0 0.0
    %1900 = vmatprep.subr.mxu0 0.0
    %1901 = vmatpush1.msra.mxu0 0.0
    %1902 = vmatprep.subr.mxu0 0.0
    %1903 = vmatpush1.msra.mxu0 0.0
    %1904 = vmatprep.subr.mxu0 0.0
    %1905 = vmatpush1.msra.mxu0 0.0
    %1906 = vmatprep.subr.mxu0 0.0
    %1907 = vmatpush1.msra.mxu0 0.0
    %1908 = vmatprep.subr.mxu0 0.0
    %1909 = vmatpush1.msra.mxu0 0.0
    %1910 = vmatprep.subr.mxu0 0.0
    %1911 = vmatpush1.msra.mxu0 0.0
    %1912 = vmatprep.subr.mxu0 0.0
    %1913 = vmatpush1.msra.mxu0 0.0
    %1914 = vmatprep.subr.mxu0 0.0
    %1915 = vmatpush1.msra.mxu0 0.0
    %1916 = vmatprep.subr.mxu0 0.0
    %1917 = vmatpush1.msra.mxu0 0.0
    %1918 = vmatprep.subr.mxu0 0.0
    %1919 = vmatpush1.msra.mxu0 0.0
    %1920 = vmatprep.subr.mxu0 0.0
    %1921 = vmatpush1.msra.mxu0 0.0
    %1922 = vmatprep.subr.mxu0 0.0
    %1923 = vmatpush1.msra.mxu0 0.0
    %1924 = vmatprep.subr.mxu0 0.0
    %1925 = vmatpush1.msra.mxu0 0.0
    %1926 = vmatprep.subr.mxu0 0.0
    %1927 = vmatpush1.msra.mxu0 0.0
    %1928 = vmatprep.subr.mxu0 0.0
    %1929 = vmatpush1.msra.mxu0 0.0
    %1930 = vmatprep.subr.mxu0 0.0
    %1931 = vmatpush1.msra.mxu0 0.0
    %1932 = vmatprep.subr.mxu0 0.0
    %1933 = vmatpush1.msra.mxu0 0.0
    %1934 = vmatprep.subr.mxu0 0.0
    %1935 = vmatpush1.msra.mxu0 0.0
    %1936 = vmatprep.subr.mxu0 0.0
    %1937 = vmatpush1.msra.mxu0 0.0
    %1938 = vmatprep.subr.mxu0 0.0
    %1939 = vmatpush1.msra.mxu0 0.0
    %1940 = vmatprep.mubr.f32.mxu0 0.0
    %1941 = vmatmul.mubr.f32.gmra.mrb[0].mxu0 %v1796
    %v1942 = vpop.f32.mrb[0].mxu0
    %v1943 = vadd.f32 1e-05, %v1942
    %v1944 = vpop.f32.mrb[0].mxu0
    %1945 = vdwg.mxu0
    %v1946 = vrsqrt.pop %v1943
    %v1948 = vrot.slane %v42, 4
    %v1950 = vmul.f32 %v1946, %v1948
    %v1951 = vlaneseq
    %v1952 = vshrl.u32 %v1951, 7
    %v1953 = vsub.s32 0, %v1952
    %v1954 = vrot.slane %v1950, %v1953
    %v1955 = vmul.f32 %v1872, %v1954
    %v1956 = vmul.f32 %v1873, %v1954
    %v1957 = vlaneseq
    %v1958 = vshrl.u32 %v1957, 7
    %v1959 = vsub.s32 5, %v1958
    %v1960 = vrot.slane %v42, %v1959
    %v1961 = vadd.f32 %v1955, %v1960
    %v1962 = vadd.f32 %v1956, %v1960
    %v1963 = vld [vmem:[#allocation5 + $0x40] sm:$0xff]
    %v1964 = vld [vmem:[#allocation5 + $0x48] sm:$0xff]
    %v1965 = vld [vmem:[#allocation5 + $0x50] sm:$0xff]
    %v1966 = vld [vmem:[#allocation5 + $0x58] sm:$0xff]
    %v1967 = vlaneseq
    %v1968 = vshrl.u32 %v1967, 7
    %v1969 = vsub.s32 2, %v1968
    %v1970 = vrot.slane %v42, %v1969
    %v1972 = vsel %vm51, %v1961, 0
    %v1975 = vsel %vm51, %v1962, 0
    %1977 = vmatprep.subr.mxu0 0.0
    %1978 = vmatpush1.msra.mxu0 %v1963
    %1979 = vmatprep.subr.mxu0 0.0
    %1980 = vmatpush1.msra.mxu0 %v1964
    %1981 = vmatprep.subr.mxu0 0.0
    %1982 = vmatpush1.msra.mxu0 %v1965
    %1983 = vmatprep.subr.mxu0 0.0
    %1984 = vmatpush1.msra.mxu0 %v1966
    %1985 = vmatprep.subr.mxu0 0.0
    %1986 = vmatpush1.msra.mxu0 0.0
    %1987 = vmatprep.subr.mxu0 0.0
    %1988 = vmatpush1.msra.mxu0 0.0
    %1989 = vmatprep.subr.mxu0 0.0
    %1990 = vmatpush1.msra.mxu0 0.0
    %1991 = vmatprep.subr.mxu0 0.0
    %1992 = vmatpush1.msra.mxu0 0.0
    %1993 = vmatprep.subr.mxu0 0.0
    %1994 = vmatpush1.msra.mxu0 0.0
    %1995 = vmatprep.subr.mxu0 0.0
    %1996 = vmatpush1.msra.mxu0 0.0
    %1997 = vmatprep.subr.mxu0 0.0
    %1998 = vmatpush1.msra.mxu0 0.0
    %1999 = vmatprep.subr.mxu0 0.0
    %2000 = vmatpush1.msra.mxu0 0.0
    %2001 = vmatprep.subr.mxu0 0.0
    %2002 = vmatpush1.msra.mxu0 0.0
    %2003 = vmatprep.subr.mxu0 0.0
    %2004 = vmatpush1.msra.mxu0 0.0
    %2005 = vmatprep.subr.mxu0 0.0
    %2006 = vmatpush1.msra.mxu0 0.0
    %2007 = vmatprep.subr.mxu0 0.0
    %2008 = vmatpush1.msra.mxu0 0.0
    %2009 = vmatprep.subr.mxu0 0.0
    %2010 = vmatpush1.msra.mxu0 0.0
    %2011 = vmatprep.subr.mxu0 0.0
    %2012 = vmatpush1.msra.mxu0 0.0
    %2013 = vmatprep.subr.mxu0 0.0
    %2014 = vmatpush1.msra.mxu0 0.0
    %2015 = vmatprep.subr.mxu0 0.0
    %2016 = vmatpush1.msra.mxu0 0.0
    %2017 = vmatprep.subr.mxu0 0.0
    %2018 = vmatpush1.msra.mxu0 0.0
    %2019 = vmatprep.subr.mxu0 0.0
    %2020 = vmatpush1.msra.mxu0 0.0
    %2021 = vmatprep.subr.mxu0 0.0
    %2022 = vmatpush1.msra.mxu0 0.0
    %2023 = vmatprep.subr.mxu0 0.0
    %2024 = vmatpush1.msra.mxu0 0.0
    %2025 = vmatprep.subr.mxu0 0.0
    %2026 = vmatpush1.msra.mxu0 0.0
    %2027 = vmatprep.subr.mxu0 0.0
    %2028 = vmatpush1.msra.mxu0 0.0
    %2029 = vmatprep.subr.mxu0 0.0
    %2030 = vmatpush1.msra.mxu0 0.0
    %2031 = vmatprep.subr.mxu0 0.0
    %2032 = vmatpush1.msra.mxu0 0.0
    %2033 = vmatprep.subr.mxu0 0.0
    %2034 = vmatpush1.msra.mxu0 0.0
    %2035 = vmatprep.subr.mxu0 0.0
    %2036 = vmatpush1.msra.mxu0 0.0
    %2037 = vmatprep.subr.mxu0 0.0
    %2038 = vmatpush1.msra.mxu0 0.0
    %2039 = vmatprep.subr.mxu0 0.0
    %2040 = vmatpush1.msra.mxu0 0.0
    %2041 = vmatprep.mubr.f32.mxu0 0.0
    %2042 = vmatmul.mubr.f32.gmra.mrb[0].mxu0 %v1972
    %v2043 = vpop.f32.mrb[0].mxu0
    %v2044 = vadd.f32 %v1970, %v2043
    %v2045 = vpop.f32.mrb[0].mxu0
    %2046 = vmatprep.mubr.f32.mxu0 0.0
    %2047 = vmatmul.mubr.f32.gmra.mrb[0].mxu0 %v1975
    %v2048 = vpop.f32.mrb[0].mxu0
    %v2049 = vadd.f32 %v1970, %v2048
    %v2050 = vpop.f32.mrb[0].mxu0
    %2051 = vdwg.mxu0
    %v2052 = vmax.f32 %v2044, 0.0
    %v2053 = vmax.f32 %v2049, 0.0
    %v2054 = vld [vmem:[#allocation5 + $0x60] sm:$0xff]
    %v2055 = vld [vmem:[#allocation5 + $0x68] sm:$0xff]
    %v2056 = vld [vmem:[#allocation5 + $0x70] sm:$0xff]
    %v2057 = vld [vmem:[#allocation5 + $0x78] sm:$0xff]
    %v2058 = vld [vmem:[#allocation5 + $0x80] sm:$0xff]
    %v2059 = vld [vmem:[#allocation5 + $0x88] sm:$0xff]
    %v2060 = vld [vmem:[#allocation5 + $0x90] sm:$0xff]
    %v2061 = vld [vmem:[#allocation5 + $0x98] sm:$0xff]
    %vm2062 = vcmask 523264
    %v2064 = vsel %vm2062, %v2052, 0
    %v2067 = vsel %vm2062, %v2053, 0
    %2069 = vmatprep.subr.mxu0 0.0
    %2070 = vmatpush1.msra.mxu0 %v2054
    %2071 = vmatprep.subr.mxu0 0.0
    %2072 = vmatpush1.msra.mxu0 %v2055
    %2073 = vmatprep.subr.mxu0 0.0
    %2074 = vmatpush1.msra.mxu0 %v2056
    %2075 = vmatprep.subr.mxu0 0.0
    %2076 = vmatpush1.msra.mxu0 %v2057
    %2077 = vmatprep.subr.mxu0 0.0
    %2078 = vmatpush1.msra.mxu0 %v2058
    %2079 = vmatprep.subr.mxu0 0.0
    %2080 = vmatpush1.msra.mxu0 %v2059
    %2081 = vmatprep.subr.mxu0 0.0
    %2082 = vmatpush1.msra.mxu0 %v2060
    %2083 = vmatprep.subr.mxu0 0.0
    %2084 = vmatpush1.msra.mxu0 %v2061
    %2085 = vmatprep.subr.mxu0 0.0
    %2086 = vmatpush1.msra.mxu0 0.0
    %2087 = vmatprep.subr.mxu0 0.0
    %2088 = vmatpush1.msra.mxu0 0.0
    %2089 = vmatprep.subr.mxu0 0.0
    %2090 = vmatpush1.msra.mxu0 0.0
    %2091 = vmatprep.subr.mxu0 0.0
    %2092 = vmatpush1.msra.mxu0 0.0
    %2093 = vmatprep.subr.mxu0 0.0
    %2094 = vmatpush1.msra.mxu0 0.0
    %2095 = vmatprep.subr.mxu0 0.0
    %2096 = vmatpush1.msra.mxu0 0.0
    %2097 = vmatprep.subr.mxu0 0.0
    %2098 = vmatpush1.msra.mxu0 0.0
    %2099 = vmatprep.subr.mxu0 0.0
    %2100 = vmatpush1.msra.mxu0 0.0
    %2101 = vmatprep.subr.mxu0 0.0
    %2102 = vmatpush1.msra.mxu0 0.0
    %2103 = vmatprep.subr.mxu0 0.0
    %2104 = vmatpush1.msra.mxu0 0.0
    %2105 = vmatprep.subr.mxu0 0.0
    %2106 = vmatpush1.msra.mxu0 0.0
    %2107 = vmatprep.subr.mxu0 0.0
    %2108 = vmatpush1.msra.mxu0 0.0
    %2109 = vmatprep.subr.mxu0 0.0
    %2110 = vmatpush1.msra.mxu0 0.0
    %2111 = vmatprep.subr.mxu0 0.0
    %2112 = vmatpush1.msra.mxu0 0.0
    %2113 = vmatprep.subr.mxu0 0.0
    %2114 = vmatpush1.msra.mxu0 0.0
    %2115 = vmatprep.subr.mxu0 0.0
    %2116 = vmatpush1.msra.mxu0 0.0
    %2117 = vmatprep.subr.mxu0 0.0
    %2118 = vmatpush1.msra.mxu0 0.0
    %2119 = vmatprep.subr.mxu0 0.0
    %2120 = vmatpush1.msra.mxu0 0.0
    %2121 = vmatprep.subr.mxu0 0.0
    %2122 = vmatpush1.msra.mxu0 0.0
    %2123 = vmatprep.subr.mxu0 0.0
    %2124 = vmatpush1.msra.mxu0 0.0
    %2125 = vmatprep.subr.mxu0 0.0
    %2126 = vmatpush1.msra.mxu0 0.0
    %2127 = vmatprep.subr.mxu0 0.0
    %2128 = vmatpush1.msra.mxu0 0.0
    %2129 = vmatprep.subr.mxu0 0.0
    %2130 = vmatpush1.msra.mxu0 0.0
    %2131 = vmatprep.subr.mxu0 0.0
    %2132 = vmatpush1.msra.mxu0 0.0
    %2133 = vmatprep.mubr.f32.mxu0 0.0
    %2134 = vmatmul.mubr.f32.gmra.mrb[0].mxu0 %v2064
    %v2135 = vpop.f32.mrb[0].mxu0
    %v2136 = vadd.f32 0.0, %v2135
    %v2137 = vpop.f32.mrb[0].mxu0
    %2138 = vmatprep.mubr.f32.mxu0 0.0
    %2139 = vmatmul.mubr.f32.gmra.mrb[0].mxu0 %v2067
    %v2140 = vpop.f32.mrb[0].mxu0
    %v2141 = vadd.f32 0.0, %v2140
    %v2142 = vpop.f32.mrb[0].mxu0
    %2143 = vdwg.mxu0
    %v2144 = vadd.f32 %v1961, %v2136
    %v2145 = vadd.f32 %v1962, %v2141
    %v2146 = vlaneseq
    %v2147 = vshrl.u32 %v2146, 7
    %v2148 = vsub.s32 3, %v2147
    %v2149 = vrot.slane %v42, %v2148
    %v2150 = vadd.f32 %v2144, %v2149
    %v2151 = vadd.f32 %v2145, %v2149
    %2152 = vmatprep.subr.mxu0 0.0
    %2153 = vmatpush1.msra.mxu0 %v2150
    %2154 = vmatprep.subr.mxu0 0.0
    %2155 = vmatpush1.msra.mxu0 %v2151
    %2156 = vmatprep.subr.mxu0 0.0
    %2157 = vmatpush1.msra.mxu0 0.0
    %2158 = vmatprep.subr.mxu0 0.0
    %2159 = vmatpush1.msra.mxu0 0.0
    %2160 = vmatprep.subr.mxu0 0.0
    %2161 = vmatpush1.msra.mxu0 0.0
    %2162 = vmatprep.subr.mxu0 0.0
    %2163 = vmatpush1.msra.mxu0 0.0
    %2164 = vmatprep.subr.mxu0 0.0
    %2165 = vmatpush1.msra.mxu0 0.0
    %2166 = vmatprep.subr.mxu0 0.0
    %2167 = vmatpush1.msra.mxu0 0.0
    %2168 = vmatprep.subr.mxu0 0.0
    %2169 = vmatpush1.msra.mxu0 0.0
    %2170 = vmatprep.subr.mxu0 0.0
    %2171 = vmatpush1.msra.mxu0 0.0
    %2172 = vmatprep.subr.mxu0 0.0
    %2173 = vmatpush1.msra.mxu0 0.0
    %2174 = vmatprep.subr.mxu0 0.0
    %2175 = vmatpush1.msra.mxu0 0.0
    %2176 = vmatprep.subr.mxu0 0.0
    %2177 = vmatpush1.msra.mxu0 0.0
    %2178 = vmatprep.subr.mxu0 0.0
    %2179 = vmatpush1.msra.mxu0 0.0
    %2180 = vmatprep.subr.mxu0 0.0
    %2181 = vmatpush1.msra.mxu0 0.0
    %2182 = vmatprep.subr.mxu0 0.0
    %2183 = vmatpush1.msra.mxu0 0.0
    %2184 = vmatprep.subr.mxu0 0.0
    %2185 = vmatpush1.msra.mxu0 0.0
    %2186 = vmatprep.subr.mxu0 0.0
    %2187 = vmatpush1.msra.mxu0 0.0
    %2188 = vmatprep.subr.mxu0 0.0
    %2189 = vmatpush1.msra.mxu0 0.0
    %2190 = vmatprep.subr.mxu0 0.0
    %2191 = vmatpush1.msra.mxu0 0.0
    %2192 = vmatprep.subr.mxu0 0.0
    %2193 = vmatpush1.msra.mxu0 0.0
    %2194 = vmatprep.subr.mxu0 0.0
    %2195 = vmatpush1.msra.mxu0 0.0
    %2196 = vmatprep.subr.mxu0 0.0
    %2197 = vmatpush1.msra.mxu0 0.0
    %2198 = vmatprep.subr.mxu0 0.0
    %2199 = vmatpush1.msra.mxu0 0.0
    %2200 = vmatprep.subr.mxu0 0.0
    %2201 = vmatpush1.msra.mxu0 0.0
    %2202 = vmatprep.subr.mxu0 0.0
    %2203 = vmatpush1.msra.mxu0 0.0
    %2204 = vmatprep.subr.mxu0 0.0
    %2205 = vmatpush1.msra.mxu0 0.0
    %2206 = vmatprep.subr.mxu0 0.0
    %2207 = vmatpush1.msra.mxu0 0.0
    %2208 = vmatprep.subr.mxu0 0.0
    %2209 = vmatpush1.msra.mxu0 0.0
    %2210 = vmatprep.subr.mxu0 0.0
    %2211 = vmatpush1.msra.mxu0 0.0
    %2212 = vmatprep.subr.mxu0 0.0
    %2213 = vmatpush1.msra.mxu0 0.0
    %2214 = vmatprep.subr.mxu0 0.0
    %2215 = vmatpush1.msra.mxu0 0.0
    %2216 = vmatprep.mubr.f32.mxu0 0.0
    %2217 = vmatmul.mubr.f32.gmra.mrb[0].mxu0 %v1796
    %v2218 = vpop.f32.mrb[0].mxu0
    %v2219 = vadd.f32 0.0, %v2218
    %v2220 = vpop.f32.mrb[0].mxu0
    %2221 = vdwg.mxu0
    %v2222 = vlaneseq
    %v2223 = vshrl.u32 %v2222, 7
    %v2224 = vsub.s32 0, %v2223
    %v2225 = vrot.slane %v2219, %v2224
    %v2226 = vsub.f32 %v2150, %v2225
    %v2227 = vsub.f32 %v2151, %v2225
    %v2228 = vmul.f32 %v2226, %v2226
    %v2229 = vmul.f32 %v2227, %v2227
    %2230 = vmatprep.subr.mxu0 0.0
    %2231 = vmatpush1.msra.mxu0 %v2228
    %2232 = vmatprep.subr.mxu0 0.0
    %2233 = vmatpush1.msra.mxu0 %v2229
    %2234 = vmatprep.subr.mxu0 0.0
    %2235 = vmatpush1.msra.mxu0 0.0
    %2236 = vmatprep.subr.mxu0 0.0
    %2237 = vmatpush1.msra.mxu0 0.0
    %2238 = vmatprep.subr.mxu0 0.0
    %2239 = vmatpush1.msra.mxu0 0.0
    %2240 = vmatprep.subr.mxu0 0.0
    %2241 = vmatpush1.msra.mxu0 0.0
    %2242 = vmatprep.subr.mxu0 0.0
    %2243 = vmatpush1.msra.mxu0 0.0
    %2244 = vmatprep.subr.mxu0 0.0
    %2245 = vmatpush1.msra.mxu0 0.0
    %2246 = vmatprep.subr.mxu0 0.0
    %2247 = vmatpush1.msra.mxu0 0.0
    %2248 = vmatprep.subr.mxu0 0.0
    %2249 = vmatpush1.msra.mxu0 0.0
    %2250 = vmatprep.subr.mxu0 0.0
    %2251 = vmatpush1.msra.mxu0 0.0
    %2252 = vmatprep.subr.mxu0 0.0
    %2253 = vmatpush1.msra.mxu0 0.0
    %2254 = vmatprep.subr.mxu0 0.0
    %2255 = vmatpush1.msra.mxu0 0.0
    %2256 = vmatprep.subr.mxu0 0.0
    %2257 = vmatpush1.msra.mxu0 0.0
    %2258 = vmatprep.subr.mxu0 0.0
    %2259 = vmatpush1.msra.mxu0 0.0
    %2260 = vmatprep.subr.mxu0 0.0
    %2261 = vmatpush1.msra.mxu0 0.0
    %2262 = vmatprep.subr.mxu0 0.0
    %2263 = vmatpush1.msra.mxu0 0.0
    %2264 = vmatprep.subr.mxu0 0.0
    %2265 = vmatpush1.msra.mxu0 0.0
    %2266 = vmatprep.subr.mxu0 0.0
    %2267 = vmatpush1.msra.mxu0 0.0
    %2268 = vmatprep.subr.mxu0 0.0
    %2269 = vmatpush1.msra.mxu0 0.0
    %2270 = vmatprep.subr.mxu0 0.0
    %2271 = vmatpush1.msra.mxu0 0.0
    %2272 = vmatprep.subr.mxu0 0.0
    %2273 = vmatpush1.msra.mxu0 0.0
    %2274 = vmatprep.subr.mxu0 0.0
    %2275 = vmatpush1.msra.mxu0 0.0
    %2276 = vmatprep.subr.mxu0 0.0
    %2277 = vmatpush1.msra.mxu0 0.0
    %2278 = vmatprep.subr.mxu0 0.0
    %2279 = vmatpush1.msra.mxu0 0.0
    %2280 = vmatprep.subr.mxu0 0.0
    %2281 = vmatpush1.msra.mxu0 0.0
    %2282 = vmatprep.subr.mxu0 0.0
    %2283 = vmatpush1.msra.mxu0 0.0
    %2284 = vmatprep.subr.mxu0 0.0
    %2285 = vmatpush1.msra.mxu0 0.0
    %2286 = vmatprep.subr.mxu0 0.0
    %2287 = vmatpush1.msra.mxu0 0.0
    %2288 = vmatprep.subr.mxu0 0.0
    %2289 = vmatpush1.msra.mxu0 0.0
    %2290 = vmatprep.subr.mxu0 0.0
    %2291 = vmatpush1.msra.mxu0 0.0
    %2292 = vmatprep.subr.mxu0 0.0
    %2293 = vmatpush1.msra.mxu0 0.0
    %2294 = vmatprep.mubr.f32.mxu0 0.0
    %2295 = vmatmul.mubr.f32.gmra.mrb[0].mxu0 %v1796
    %v2296 = vpop.f32.mrb[0].mxu0
    %v2297 = vadd.f32 1e-05, %v2296
    %v2298 = vpop.f32.mrb[0].mxu0
    %2299 = vdwg.mxu0
    %v2300 = vrsqrt.pop %v2297
    %v2301 = vrot.slane %v42, 6
    %v2303 = vmul.f32 %v2300, %v2301
    %v2304 = vlaneseq
    %v2305 = vshrl.u32 %v2304, 7
    %v2306 = vsub.s32 0, %v2305
    %v2307 = vrot.slane %v2303, %v2306
    %v2308 = vmul.f32 %v2226, %v2307
    %v2309 = vmul.f32 %v2227, %v2307
    %v2310 = vlaneseq
    %v2311 = vshrl.u32 %v2310, 7
    %v2312 = vsub.s32 7, %v2311
    %v2313 = vrot.slane %v42, %v2312
    %v2314 = vadd.f32 %v2308, %v2313
    %v2315 = vadd.f32 %v2309, %v2313
    %2316 = vst.msk [vmem:[#allocation7] sm:$0xff] %vm51, %v2314
    %2317 = vst.msk [vmem:[#allocation7 + $0x8] sm:$0xff] %vm51, %v2315
    // Predicated region
    $region18: #{tpu_custom_call.1} parent=1 // pred_check
      _
    $region19: #{tpu_custom_call.1} parent=1 // pred_check_branch
      %2319 = sbr.rel (0) target = $region21
    $region20: #{tpu_custom_call.1} parent=1 // pred_region
      %s2321 = ssub.s32 256, 256
      %2322 = vsyncadd [#allocation4], %s2321
      %s2323 = sshll.u32 [#allocation7], 4
      %s2324 = int_to_ptr.vmem [resolvable:$true] %s2323
      %2329 = dma.vmem_to_hbm [thread:$0]  %s2324, 256, %s2, [#allocation4], 128, 128, 8
    $region21: #{tpu_custom_call.1} parent=1 // pred_fallthru
      _
    // Predicated region
    $region22: #{tpu_custom_call.1} parent=1 // pred_check
      _
    $region23: #{tpu_custom_call.1} parent=1 // pred_check_branch
      %2331 = sbr.rel (0) target = $region25
    $region24: #{tpu_custom_call.1} parent=1 // pred_region
      %2332 = dma.done [#allocation4], 256
    $region25: #{tpu_custom_call.1} parent=1 // pred_fallthru
      _
    %2333 = vsyncpa [#allocation3], 1
    %2334 = vsyncpa [#allocation6], 1
    %2335 = vsyncpa [#allocation4], 1

</llo_original>
